<compile_context>
chip_gen: v5e
topology: v5e:2x2
jax: 0.10.0
libtpu: 0.0.40
codegen_flags: <defaults>
</compile_context>

<pallas_src>
import functools
import math

import jax
import jax.numpy as jnp
from jax.experimental import pallas as pl
from jax.experimental.pallas import tpu as pltpu


def _round_up(n, m):
    return ((n + m - 1) // m) * m


# --------------------------------------------------------------------------- #
# Pallas kernel: whole Decoder (all layers + final norm + projection)
# grid = (B, n_layers); batch outer ("parallel"), layers inner ("arbitrary")
# --------------------------------------------------------------------------- #
def _decoder_kernel(
    x_ref, cr_ref, crT_ref,
    wq_ref, wkT_ref, wv_ref, wo_ref, w1_ref, w2_ref,
    vec_ref, fin_ref, wp_ref, bp_ref,
    out_ref,
    x_state,                       # VMEM scratch (l_pad, d_pad) f32, per-batch
    *, d_model, d_pad, ff_pad, s_len,
):
    layer = pl.program_id(1)
    n_layers = pl.num_programs(1)
    eps = jnp.float32(1e-5)
    inv_d = jnp.float32(1.0 / d_model)

    # Seed the VMEM-resident decoder state once per batch block (layer axis is
    # the inner grid dim, so layer == 0 marks a fresh batch).
    @pl.when(layer == 0)
    def _():
        x_state[...] = x_ref[...]

    # Packed per-layer small vectors: one DMA instead of ten tiny ones.
    vecs = vec_ref[...]                         # (16, vec_w) f32
    bq = vecs[0:1, :d_pad]                      # already scaled by 1/sqrt(d)
    bv = vecs[2:3, :d_pad]
    bo = vecs[3:4, :d_pad]
    b1 = vecs[4:5, :ff_pad]
    b2 = vecs[5:6, :d_pad]
    g1 = vecs[6:7, :d_pad]
    be1 = vecs[7:8, :d_pad]
    g2 = vecs[8:9, :d_pad]
    be2 = vecs[9:10, :d_pad]
    # NOTE: bk (row 1) adds the same constant (q . bk) to every score column of
    # a query, which cancels under softmax shift invariance -> not computed.

    x = x_state[...]                            # (l_pad, d_pad) f32
    xb = x.astype(jnp.bfloat16)
    cr = cr_ref[...]                            # (s_pad, d_pad) bf16
    crT = crT_ref[...]                          # (d_pad, s_pad) bf16

    # Q (scale folded into Wq/bq by the wrapper), K^T, V.  All plain A@B MXU
    # matmuls (Wk is pre-transposed, cross is passed pre-transposed too), so no
    # in-kernel XLU transposes.
    q = jnp.dot(xb, wq_ref[...], preferred_element_type=jnp.float32) + bq
    kT = jnp.dot(wkT_ref[...], crT, preferred_element_type=jnp.float32)
    v = jnp.dot(cr, wv_ref[...], preferred_element_type=jnp.float32) + bv

    # Per-batch (l_pad, s_pad) scores: only this batch's block of the attention
    # matrix is ever computed (no collapsed (B*L, B*S) matmul / dense bias).
    scores = jnp.dot(q.astype(jnp.bfloat16), kT.astype(jnp.bfloat16),
                     preferred_element_type=jnp.float32)
    col = jax.lax.broadcasted_iota(jnp.int32, scores.shape, 1)
    scores = jnp.where(col < s_len, scores, jnp.float32(-1e30))  # mask S pad
    # TODO(synk): an optional cross_mask would be applied here as a per-batch
    # additive bias block; the module default (None) needs nothing.

    m = jnp.max(scores, axis=-1, keepdims=True)
    p = jnp.exp(scores - m)                                      # EUP
    denom = jnp.sum(p, axis=-1, keepdims=True)                   # XLU

    # Softmax normalization applied AFTER the AV matmul: one (l_pad, d_pad)
    # scale instead of an (l_pad, s_pad) one.  Exact division for parity.
    av = jnp.dot(p.astype(jnp.bfloat16), v.astype(jnp.bfloat16),
                 preferred_element_type=jnp.float32) / denom
    attn_out = jnp.dot(av.astype(jnp.bfloat16), wo_ref[...],
                       preferred_element_type=jnp.float32) + bo

    # Residual + LayerNorm 1.  Padded feature columns are kept exactly zero
    # everywhere (zero-padded weights, gamma, beta), so sums over the padded
    # lane dim equal sums over the real d_model features: normalize with
    # 1/d_model, no masking needed.
    h = x + attn_out
    mu = jnp.sum(h, axis=-1, keepdims=True) * inv_d
    var = jnp.maximum(jnp.sum(h * h, axis=-1, keepdims=True) * inv_d - mu * mu, 0.0)
    hn = (h - mu) * jax.lax.rsqrt(var + eps) * g1 + be1

    # Feed-forward.
    ff = jnp.dot(hn.astype(jnp.bfloat16), w1_ref[...],
                 preferred_element_type=jnp.float32) + b1
    ff = jnp.maximum(ff, 0.0)
    ff = jnp.dot(ff.astype(jnp.bfloat16), w2_ref[...],
                 preferred_element_type=jnp.float32) + b2

    # Residual + LayerNorm 2 -> next layer's input (stays resident in VMEM).
    z = hn + ff
    mu2 = jnp.sum(z, axis=-1, keepdims=True) * inv_d
    var2 = jnp.maximum(jnp.sum(z * z, axis=-1, keepdims=True) * inv_d - mu2 * mu2, 0.0)
    x_state[...] = (z - mu2) * jax.lax.rsqrt(var2 + eps) * g2 + be2

    # Final norm + projection fused into the last layer step.  The projection
    # output is zero-padded to a 128-lane multiple, so the kernel's only HBM
    # store is lane-dense (unmasked vst).
    @pl.when(layer == n_layers - 1)
    def _():
        xf = x_state[...]
        muf = jnp.sum(xf, axis=-1, keepdims=True) * inv_d
        varf = jnp.maximum(
            jnp.sum(xf * xf, axis=-1, keepdims=True) * inv_d - muf * muf, 0.0)
        xn = (xf - muf) * jax.lax.rsqrt(varf + eps) * fin_ref[0:1, :] + fin_ref[1:2, :]
        proj = jnp.dot(xn.astype(jnp.bfloat16), wp_ref[...],
                       preferred_element_type=jnp.float32) + bp_ref[...]
        out_ref[...] = proj.astype(out_ref.dtype)


# --------------------------------------------------------------------------- #
# Wrapper-side layout plumbing: padding, Wk transpose, scale folding, packing
# --------------------------------------------------------------------------- #
def _prepare_kernel_params(params, d_pad, ff_pad, c_pad, vec_w):
    st = params['layers']
    n_layers, d_model, _ = st['wq'].shape
    d_ff = st['w1'].shape[-1]
    scale = jnp.float32(1.0 / math.sqrt(d_model))

    def pad_w(w, r, c):
        buf = jnp.zeros((n_layers, r, c), jnp.float32)
        return buf.at[:, :w.shape[1], :w.shape[2]].set(w).astype(jnp.bfloat16)

    wq = pad_w(st['wq'] * scale, d_pad, d_pad)            # fold 1/sqrt(d) into Wq
    wkT = pad_w(jnp.swapaxes(st['wk'], 1, 2), d_pad, d_pad)  # pre-transposed Wk
    wv = pad_w(st['wv'], d_pad, d_pad)
    wo = pad_w(st['wo'], d_pad, d_pad)
    w1 = pad_w(st['w1'], d_pad, ff_pad)
    w2 = pad_w(st['w2'], ff_pad, d_pad)

    # Pack all tiny per-layer vectors into one (n_layers, 16, vec_w) array.
    vec = jnp.zeros((n_layers, 16, vec_w), jnp.float32)
    packed_rows = [
        (0, st['bq'] * scale), (1, st['bk']), (2, st['bv']), (3, st['bo']),
        (4, st['b1']), (5, st['b2']),
        (6, st['g1']), (7, st['be1']), (8, st['g2']), (9, st['be2']),
    ]
    for row, val in packed_rows:
        vec = vec.at[:, row, :val.shape[-1]].set(val)

    gf, bef = params['norm']
    fin = jnp.zeros((2, d_pad), jnp.float32).at[0, :d_model].set(gf)
    fin = fin.at[1, :d_model].set(bef)

    wp, bp = params['projection']
    c_out = wp.shape[-1]
    wp_p = jnp.zeros((d_pad, c_pad), jnp.float32).at[:d_model, :c_out].set(wp)
    wp_p = wp_p.astype(jnp.bfloat16)
    bp_p = jnp.zeros((1, c_pad), jnp.float32).at[0, :c_out].set(bp)

    return dict(wq=wq, wkT=wkT, wv=wv, wo=wo, w1=w1, w2=w2,
                vec=vec, fin=fin, wp=wp_p, bp=bp_p)


def run_decoder(x, cross, params, cross_mask=None):
    if cross_mask is not None:
        # TODO(synk): cross_mask would be passed as a per-batch additive bias
        # block (B, l_pad, s_pad); the module default is None.
        raise NotImplementedError("cross_mask is not wired into the fused kernel")

    B, L, D = x.shape
    _, S, _ = cross.shape
    layers = params['layers']
    n_layers = layers['wq'].shape[0]
    d_ff = layers['w1'].shape[-1]
    c_out = params['projection'][0].shape[-1]

    # MXU / lane-friendly padded sizes (multiples of 128 on the lane dims).
    d_pad = _round_up(D, 128)
    ff_pad = _round_up(d_ff, 128)
    s_pad = _round_up(S, 128)
    l_pad = _round_up(L, 8)
    c_pad = _round_up(c_out, 128)
    vec_w = max(d_pad, ff_pad)

    kp = _prepare_kernel_params(params, d_pad, ff_pad, c_pad, vec_w)

    # Activations: x stays f32 (residual-stream precision); cross -> bf16 and
    # is passed both normally (for V) and pre-transposed (for K^T) so the
    # kernel never transposes on the XLU.
    xf = x.astype(jnp.float32)
    x_p = jnp.zeros((B, l_pad, d_pad), jnp.float32).at[:, :L, :D].set(xf)
    crf = cross.astype(jnp.float32)
    cr_p = jnp.zeros((B, s_pad, d_pad), jnp.float32).at[:, :S, :D].set(crf)
    cr_p = cr_p.astype(jnp.bfloat16)
    crT_p = jnp.zeros((B, d_pad, s_pad), jnp.float32).at[:, :D, :S].set(
        jnp.swapaxes(crf, 1, 2)).astype(jnp.bfloat16)

    def batch_spec(r, c):
        return pl.BlockSpec((None, r, c), lambda b, l: (b, 0, 0))

    def layer_spec(r, c):
        return pl.BlockSpec((None, r, c), lambda b, l: (l, 0, 0))

    def const_spec(r, c):
        return pl.BlockSpec((r, c), lambda b, l: (0, 0))

    in_specs = [
        batch_spec(l_pad, d_pad),      # x
        batch_spec(s_pad, d_pad),      # cross
        batch_spec(d_pad, s_pad),      # cross^T
        layer_spec(d_pad, d_pad),      # Wq (scaled)
        layer_spec(d_pad, d_pad),      # Wk^T
        layer_spec(d_pad, d_pad),      # Wv
        layer_spec(d_pad, d_pad),      # Wo
        layer_spec(d_pad, ff_pad),     # W1
        layer_spec(ff_pad, d_pad),     # W2
        layer_spec(16, vec_w),         # packed per-layer bias / LN vectors
        const_spec(2, d_pad),          # final norm gamma / beta
        const_spec(d_pad, c_pad),      # projection weight (lane-dense padded)
        const_spec(1, c_pad),          # projection bias
    ]
    out_spec = batch_spec(l_pad, c_pad)

    # Explicit scoped-VMEM limit (defaults: 16 MiB v5e / 32 MiB v6e-v7x; v7x
    # only has 64 MiB physical): ~2x the double-buffered block set + headroom,
    # clamped to stay inside every generation's physical VMEM.
    block_bytes = (
        l_pad * d_pad * 4 + 2 * s_pad * d_pad * 2
        + 4 * d_pad * d_pad * 2 + 2 * d_pad * ff_pad * 2
        + 16 * vec_w * 4 + 2 * d_pad * 4
        + d_pad * c_pad * 2 + c_pad * 4
        + l_pad * c_pad * 4)
    vmem_limit = int(min(48 << 20, max(16 << 20, 2 * block_bytes + (8 << 20))))

    kernel = functools.partial(_decoder_kernel, d_model=D, d_pad=d_pad,
                               ff_pad=ff_pad, s_len=S)

    out = pl.pallas_call(
        kernel,
        out_shape=jax.ShapeDtypeStruct((B, l_pad, c_pad), jnp.float32),
        grid_spec=pltpu.PrefetchScalarGridSpec(
            num_scalar_prefetch=0,
            grid=(B, n_layers),                 # batch outer, layers inner
            in_specs=in_specs,
            out_specs=out_spec,
            scratch_shapes=[pltpu.VMEM((l_pad, d_pad), jnp.float32)],
        ),
        compiler_params=pltpu.CompilerParams(
            # batch rows are independent -> "parallel" (v7x megacore);
            # the layer axis carries x_state -> "arbitrary".
            dimension_semantics=("parallel", "arbitrary"),
            vmem_limit_bytes=vmem_limit,
        ),
    )(x_p, cr_p, crT_p,
      kp['wq'], kp['wkT'], kp['wv'], kp['wo'], kp['w1'], kp['w2'],
      kp['vec'], kp['fin'], kp['wp'], kp['bp'])

    return out[:, :L, :c_out].astype(x.dtype)


def decoder_forward(x, cross, params, x_mask=None, cross_mask=None,
                    is_training=False):
    """Mirrors Decoder.forward: run layers (fused in-kernel), collect per-layer
    omega/theta penalties, final norm, projection."""
    # TODO(synk): x_mask is accepted for API parity; the concrete layer used
    # here is cross-attention + FFN only, so there is no self-attention for it
    # to act on.
    n_layers = params['omega'].shape[0]
    # O(D) parameter-only reductions: plain JAX outside the kernel.
    omegas_penalties = [jnp.mean(params['omega'][i] ** 2) for i in range(n_layers)]
    thetas_penalties = [jnp.mean(params['theta'][i] ** 2) for i in range(n_layers)]
    out = run_decoder(x, cross, params, cross_mask=cross_mask)
    return out, omegas_penalties, thetas_penalties


# --------------------------------------------------------------------------- #
# Deterministic parameter construction (natural f32, stacked per layer)
# --------------------------------------------------------------------------- #
def make_params(key, num_layers, d_model, d_ff, c_out):
    def dense(k, fan_in, fan_out):
        kw, kb = jax.random.split(k)
        w = jax.random.normal(kw, (fan_in, fan_out), jnp.float32) / jnp.sqrt(fan_in)
        b = 0.01 * jax.random.normal(kb, (fan_out,), jnp.float32)
        return w, b

    names = ('wq', 'bq', 'wk', 'bk', 'wv', 'bv', 'wo', 'bo',
             'w1', 'b1', 'w2', 'b2', 'g1', 'be1', 'g2', 'be2')
    per = {n: [] for n in names}
    omegas, thetas = [], []
    for i in range(num_layers):
        k = jax.random.fold_in(key, i)
        ks = jax.random.split(k, 8)
        for nm, kk in (('q', ks[0]), ('k', ks[1]), ('v', ks[2]), ('o', ks[3])):
            w, b = dense(kk, d_model, d_model)
            per['w' + nm].append(w)
            per['b' + nm].append(b)
        w1, b1 = dense(ks[4], d_model, d_ff)
        w2, b2 = dense(ks[5], d_ff, d_model)
        per['w1'].append(w1); per['b1'].append(b1)
        per['w2'].append(w2); per['b2'].append(b2)
        per['g1'].append(jnp.ones((d_model,), jnp.float32))
        per['be1'].append(jnp.zeros((d_model,), jnp.float32))
        per['g2'].append(jnp.ones((d_model,), jnp.float32))
        per['be2'].append(jnp.zeros((d_model,), jnp.float32))
        omegas.append(0.1 * jax.random.normal(ks[6], (d_model,), jnp.float32))
        thetas.append(0.1 * jax.random.normal(ks[7], (d_model,), jnp.float32))

    layers = {n: jnp.stack(v) for n, v in per.items()}
    kp = jax.random.fold_in(key, 1000)
    wp, bp = dense(kp, d_model, c_out)
    return {
        'layers': layers,
        'omega': jnp.stack(omegas),
        'theta': jnp.stack(thetas),
        'norm': (jnp.ones((d_model,), jnp.float32),
                 jnp.zeros((d_model,), jnp.float32)),
        'projection': (wp, bp),
    }


# --------------------------------------------------------------------------- #
if __name__ == "__main__":
    B, L_DEC, L_ENC, D_MODEL, D_FF, C_OUT, N_LAYERS = 2, 8, 12, 32, 64, 4, 2

    key = jax.random.PRNGKey(0)
    kx, kc, kp = jax.random.split(key, 3)
    x = jax.random.normal(kx, (B, L_DEC, D_MODEL), jnp.float32)
    cross = jax.random.normal(kc, (B, L_ENC, D_MODEL), jnp.float32)
    params = make_params(kp, N_LAYERS, D_MODEL, D_FF, C_OUT)

    out, omegas_penalties, thetas_penalties = decoder_forward(
        x, cross, params, x_mask=None, cross_mask=None, is_training=False)

    jax.block_until_ready(out)
    jax.block_until_ready(omegas_penalties)
    jax.block_until_ready(thetas_penalties)

    assert out.shape == (B, L_DEC, C_OUT)
    assert bool(jnp.all(jnp.isfinite(out)))
    assert len(omegas_penalties) == N_LAYERS
    assert len(thetas_penalties) == N_LAYERS
    print("KERNEL_OK")
</pallas_src>

<mosaic_0001>
module attributes {stable_mosaic.version = 11 : i64} {
  func.func @_decoder_kernel(%arg0: i32, %arg1: i32, %arg2: memref<1x8x128xf32, #tpu.memory_space<vmem>>, %arg3: memref<1x128x128xbf16, #tpu.memory_space<vmem>>, %arg4: memref<1x128x128xbf16, #tpu.memory_space<vmem>>, %arg5: memref<1x128x128xbf16, #tpu.memory_space<vmem>>, %arg6: memref<1x128x128xbf16, #tpu.memory_space<vmem>>, %arg7: memref<1x128x128xbf16, #tpu.memory_space<vmem>>, %arg8: memref<1x128x128xbf16, #tpu.memory_space<vmem>>, %arg9: memref<1x128x128xbf16, #tpu.memory_space<vmem>>, %arg10: memref<1x128x128xbf16, #tpu.memory_space<vmem>>, %arg11: memref<1x16x128xf32, #tpu.memory_space<vmem>>, %arg12: memref<2x128xf32, #tpu.memory_space<vmem>>, %arg13: memref<128x128xbf16, #tpu.memory_space<vmem>>, %arg14: memref<1x128xf32, #tpu.memory_space<vmem>>, %arg15: memref<1x8x128xf32, #tpu.memory_space<vmem>>, %arg16: memref<8x128xf32, #tpu.memory_space<vmem>>) attributes {dimension_semantics = [#tpu.dimension_semantics<parallel>, #tpu.dimension_semantics<arbitrary>], iteration_bounds = array<i64: 2, 2>, scalar_prefetch = 0 : i64, scratch_operands = 1 : i64, tpu.core_type = #tpu.core_type<tc>, window_params = [{transform_indices = @transform_0, window_bounds = array<i64: 1, 8, 128>}, {transform_indices = @transform_1, window_bounds = array<i64: 1, 128, 128>}, {transform_indices = @transform_2, window_bounds = array<i64: 1, 128, 128>}, {transform_indices = @transform_3, window_bounds = array<i64: 1, 128, 128>}, {transform_indices = @transform_4, window_bounds = array<i64: 1, 128, 128>}, {transform_indices = @transform_5, window_bounds = array<i64: 1, 128, 128>}, {transform_indices = @transform_6, window_bounds = array<i64: 1, 128, 128>}, {transform_indices = @transform_7, window_bounds = array<i64: 1, 128, 128>}, {transform_indices = @transform_8, window_bounds = array<i64: 1, 128, 128>}, {transform_indices = @transform_9, window_bounds = array<i64: 1, 16, 128>}, {pipeline_mode = #tpu.pipeline_mode<synchronous>, transform_indices = @transform_10, window_bounds = array<i64: 2, 128>}, {pipeline_mode = #tpu.pipeline_mode<synchronous>, transform_indices = @transform_11, window_bounds = array<i64: 128, 128>}, {pipeline_mode = #tpu.pipeline_mode<synchronous>, transform_indices = @transform_12, window_bounds = array<i64: 1, 128>}, {transform_indices = @transform_13, window_bounds = array<i64: 1, 8, 128>}]} {
    %c0_i32 = arith.constant 0 : i32
    %0 = arith.cmpi eq, %arg1, %c0_i32 : i32
    %1 = arith.extui %0 : i1 to i32
    %c0_i32_0 = arith.constant 0 : i32
    %2 = arith.cmpi ne, %1, %c0_i32_0 : i32
    scf.if %2 {
      %c0_57 = arith.constant 0 : index
      %c0_58 = arith.constant 0 : index
      %c0_59 = arith.constant 0 : index
      %127 = vector.load %arg2[%c0_57, %c0_58, %c0_59] : memref<1x8x128xf32, #tpu.memory_space<vmem>>, vector<1x8x128xf32>
      %128 = vector.shape_cast %127 : vector<1x8x128xf32> to vector<8x128xf32>
      %c0_60 = arith.constant 0 : index
      %c0_61 = arith.constant 0 : index
      %129 = vector.load %arg16[%c0_60, %c0_61] : memref<8x128xf32, #tpu.memory_space<vmem>>, vector<8x128xf32>
      tpu.vector_store %arg16[%c0_60, %c0_61], %128 {strides = array<i32>} : memref<8x128xf32, #tpu.memory_space<vmem>>, vector<8x128xf32>,
    } else {
    }
    %c0 = arith.constant 0 : index
    %c0_1 = arith.constant 0 : index
    %c0_2 = arith.constant 0 : index
    %3 = vector.load %arg11[%c0, %c0_1, %c0_2] : memref<1x16x128xf32, #tpu.memory_space<vmem>>, vector<1x16x128xf32>
    %4 = vector.shape_cast %3 : vector<1x16x128xf32> to vector<16x128xf32>
    %5 = vector.extract_strided_slice %4 {offsets = [0, 0], sizes = [1, 128], strides = [1, 1]} : vector<16x128xf32> to vector<1x128xf32>
    %6 = vector.extract_strided_slice %4 {offsets = [2, 0], sizes = [1, 128], strides = [1, 1]} : vector<16x128xf32> to vector<1x128xf32>
    %7 = vector.extract_strided_slice %4 {offsets = [3, 0], sizes = [1, 128], strides = [1, 1]} : vector<16x128xf32> to vector<1x128xf32>
    %8 = vector.extract_strided_slice %4 {offsets = [4, 0], sizes = [1, 128], strides = [1, 1]} : vector<16x128xf32> to vector<1x128xf32>
    %9 = vector.extract_strided_slice %4 {offsets = [5, 0], sizes = [1, 128], strides = [1, 1]} : vector<16x128xf32> to vector<1x128xf32>
    %10 = vector.extract_strided_slice %4 {offsets = [6, 0], sizes = [1, 128], strides = [1, 1]} : vector<16x128xf32> to vector<1x128xf32>
    %11 = vector.extract_strided_slice %4 {offsets = [7, 0], sizes = [1, 128], strides = [1, 1]} : vector<16x128xf32> to vector<1x128xf32>
    %12 = vector.extract_strided_slice %4 {offsets = [8, 0], sizes = [1, 128], strides = [1, 1]} : vector<16x128xf32> to vector<1x128xf32>
    %13 = vector.extract_strided_slice %4 {offsets = [9, 0], sizes = [1, 128], strides = [1, 1]} : vector<16x128xf32> to vector<1x128xf32>
    %c0_3 = arith.constant 0 : index
    %c0_4 = arith.constant 0 : index
    %14 = vector.load %arg16[%c0_3, %c0_4] : memref<8x128xf32, #tpu.memory_space<vmem>>, vector<8x128xf32>
    %15 = arith.truncf %14 : vector<8x128xf32> to vector<8x128xbf16>
    %c0_5 = arith.constant 0 : index
    %c0_6 = arith.constant 0 : index
    %c0_7 = arith.constant 0 : index
    %16 = vector.load %arg3[%c0_5, %c0_6, %c0_7] : memref<1x128x128xbf16, #tpu.memory_space<vmem>>, vector<1x128x128xbf16>
    %17 = vector.shape_cast %16 : vector<1x128x128xbf16> to vector<128x128xbf16>
    %c0_8 = arith.constant 0 : index
    %c0_9 = arith.constant 0 : index
    %c0_10 = arith.constant 0 : index
    %18 = vector.load %arg4[%c0_8, %c0_9, %c0_10] : memref<1x128x128xbf16, #tpu.memory_space<vmem>>, vector<1x128x128xbf16>
    %19 = vector.shape_cast %18 : vector<1x128x128xbf16> to vector<128x128xbf16>
    %c0_11 = arith.constant 0 : index
    %c0_12 = arith.constant 0 : index
    %c0_13 = arith.constant 0 : index
    %20 = vector.load %arg5[%c0_11, %c0_12, %c0_13] : memref<1x128x128xbf16, #tpu.memory_space<vmem>>, vector<1x128x128xbf16>
    %21 = vector.shape_cast %20 : vector<1x128x128xbf16> to vector<128x128xbf16>
    %cst = arith.constant dense<0.000000e+00> : vector<8x128xf32>
    %22 = tpu.matmul %15, %21, %cst {dimension_numbers = #tpu.dot_dimension_numbers<[1], [0], [0], [1], [0, 0, 1, 1], [], []>} : vector<8x128xbf16>, vector<128x128xbf16>, vector<8x128xf32> -> vector<8x128xf32>
    %23 = vector.broadcast %5 : vector<1x128xf32> to vector<8x128xf32>
    %24 = arith.addf %22, %23 : vector<8x128xf32>
    %c0_14 = arith.constant 0 : index
    %c0_15 = arith.constant 0 : index
    %c0_16 = arith.constant 0 : index
    %25 = vector.load %arg6[%c0_14, %c0_15, %c0_16] : memref<1x128x128xbf16, #tpu.memory_space<vmem>>, vector<1x128x128xbf16>
    %26 = vector.shape_cast %25 : vector<1x128x128xbf16> to vector<128x128xbf16>
    %cst_17 = arith.constant dense<0.000000e+00> : vector<128x128xf32>
    %27 = tpu.matmul %26, %19, %cst_17 {dimension_numbers = #tpu.dot_dimension_numbers<[1], [0], [0], [1], [0, 0, 1, 1], [], []>} : vector<128x128xbf16>, vector<128x128xbf16>, vector<128x128xf32> -> vector<128x128xf32>
    %c0_18 = arith.constant 0 : index
    %c0_19 = arith.constant 0 : index
    %c0_20 = arith.constant 0 : index
    %28 = vector.load %arg7[%c0_18, %c0_19, %c0_20] : memref<1x128x128xbf16, #tpu.memory_space<vmem>>, vector<1x128x128xbf16>
    %29 = vector.shape_cast %28 : vector<1x128x128xbf16> to vector<128x128xbf16>
    %cst_21 = arith.constant dense<0.000000e+00> : vector<128x128xf32>
    %30 = tpu.matmul %17, %29, %cst_21 {dimension_numbers = #tpu.dot_dimension_numbers<[1], [0], [0], [1], [0, 0, 1, 1], [], []>} : vector<128x128xbf16>, vector<128x128xbf16>, vector<128x128xf32> -> vector<128x128xf32>
    %31 = vector.broadcast %6 : vector<1x128xf32> to vector<128x128xf32>
    %32 = arith.addf %30, %31 : vector<128x128xf32>
    %33 = arith.truncf %24 : vector<8x128xf32> to vector<8x128xbf16>
    %34 = arith.truncf %27 : vector<128x128xf32> to vector<128x128xbf16>
    %cst_22 = arith.constant dense<0.000000e+00> : vector<8x128xf32>
    %35 = tpu.matmul %33, %34, %cst_22 {dimension_numbers = #tpu.dot_dimension_numbers<[1], [0], [0], [1], [0, 0, 1, 1], [], []>} : vector<8x128xbf16>, vector<128x128xbf16>, vector<8x128xf32> -> vector<8x128xf32>
    %36 = tpu.iota {dimensions = array<i32: 1>} : vector<8x128xi32>
    %c12_i32 = arith.constant 12 : i32
    %37 = vector.broadcast %c12_i32 : i32 to vector<8x128xi32>
    %38 = arith.cmpi slt, %36, %37 : vector<8x128xi32>
    %cst_23 = arith.constant -1.000000e+30 : f32
    %39 = vector.broadcast %cst_23 : f32 to vector<8x128xf32>
    %40 = arith.select %38, %35, %39 : vector<8x128xi1>, vector<8x128xf32>
    %cst_24 = arith.constant dense<0xFF800000> : vector<8xf32>
    %41 = vector.multi_reduction <maximumf>, %40, %cst_24 [1] : vector<8x128xf32> to vector<8xf32>
    %42 = vector.shape_cast %41 : vector<8xf32> to vector<8x1xf32>
    %43 = vector.broadcast %42 : vector<8x1xf32> to vector<8x128xf32>
    %44 = arith.subf %40, %43 : vector<8x128xf32>
    %45 = math.exp %44 : vector<8x128xf32>
    %cst_25 = arith.constant dense<0.000000e+00> : vector<8xf32>
    %46 = vector.multi_reduction <add>, %45, %cst_25 [1] : vector<8x128xf32> to vector<8xf32>
    %47 = vector.shape_cast %46 : vector<8xf32> to vector<8x1xf32>
    %48 = arith.truncf %45 : vector<8x128xf32> to vector<8x128xbf16>
    %49 = arith.truncf %32 : vector<128x128xf32> to vector<128x128xbf16>
    %cst_26 = arith.constant dense<0.000000e+00> : vector<8x128xf32>
    %50 = tpu.matmul %48, %49, %cst_26 {dimension_numbers = #tpu.dot_dimension_numbers<[1], [0], [0], [1], [0, 0, 1, 1], [], []>} : vector<8x128xbf16>, vector<128x128xbf16>, vector<8x128xf32> -> vector<8x128xf32>
    %51 = vector.broadcast %47 : vector<8x1xf32> to vector<8x128xf32>
    %52 = arith.divf %50, %51 : vector<8x128xf32>
    %53 = arith.truncf %52 : vector<8x128xf32> to vector<8x128xbf16>
    %c0_27 = arith.constant 0 : index
    %c0_28 = arith.constant 0 : index
    %c0_29 = arith.constant 0 : index
    %54 = vector.load %arg8[%c0_27, %c0_28, %c0_29] : memref<1x128x128xbf16, #tpu.memory_space<vmem>>, vector<1x128x128xbf16>
    %55 = vector.shape_cast %54 : vector<1x128x128xbf16> to vector<128x128xbf16>
    %cst_30 = arith.constant dense<0.000000e+00> : vector<8x128xf32>
    %56 = tpu.matmul %53, %55, %cst_30 {dimension_numbers = #tpu.dot_dimension_numbers<[1], [0], [0], [1], [0, 0, 1, 1], [], []>} : vector<8x128xbf16>, vector<128x128xbf16>, vector<8x128xf32> -> vector<8x128xf32>
    %57 = vector.broadcast %7 : vector<1x128xf32> to vector<8x128xf32>
    %58 = arith.addf %56, %57 : vector<8x128xf32>
    %59 = arith.addf %14, %58 : vector<8x128xf32>
    %cst_31 = arith.constant dense<0.000000e+00> : vector<8xf32>
    %60 = vector.multi_reduction <add>, %59, %cst_31 [1] : vector<8x128xf32> to vector<8xf32>
    %61 = vector.shape_cast %60 : vector<8xf32> to vector<8x1xf32>
    %cst_32 = arith.constant 3.125000e-02 : f32
    %62 = vector.broadcast %cst_32 : f32 to vector<8x1xf32>
    %63 = arith.mulf %61, %62 : vector<8x1xf32>
    %64 = arith.mulf %59, %59 : vector<8x128xf32>
    %cst_33 = arith.constant dense<0.000000e+00> : vector<8xf32>
    %65 = vector.multi_reduction <add>, %64, %cst_33 [1] : vector<8x128xf32> to vector<8xf32>
    %66 = vector.shape_cast %65 : vector<8xf32> to vector<8x1xf32>
    %cst_34 = arith.constant 3.125000e-02 : f32
    %67 = vector.broadcast %cst_34 : f32 to vector<8x1xf32>
    %68 = arith.mulf %66, %67 : vector<8x1xf32>
    %69 = arith.mulf %63, %63 : vector<8x1xf32>
    %70 = arith.subf %68, %69 : vector<8x1xf32>
    %cst_35 = arith.constant 0.000000e+00 : f32
    %71 = vector.broadcast %cst_35 : f32 to vector<8x1xf32>
    %72 = arith.maximumf %70, %71 : vector<8x1xf32>
    %73 = vector.broadcast %63 : vector<8x1xf32> to vector<8x128xf32>
    %74 = arith.subf %59, %73 : vector<8x128xf32>
    %cst_36 = arith.constant 9.99999974E-6 : f32
    %75 = vector.broadcast %cst_36 : f32 to vector<8x1xf32>
    %76 = arith.addf %72, %75 : vector<8x1xf32>
    %77 = math.rsqrt %76 : vector<8x1xf32>
    %78 = vector.broadcast %77 : vector<8x1xf32> to vector<8x128xf32>
    %79 = arith.mulf %74, %78 : vector<8x128xf32>
    %80 = vector.broadcast %10 : vector<1x128xf32> to vector<8x128xf32>
    %81 = arith.mulf %79, %80 : vector<8x128xf32>
    %82 = vector.broadcast %11 : vector<1x128xf32> to vector<8x128xf32>
    %83 = arith.addf %81, %82 : vector<8x128xf32>
    %84 = arith.truncf %83 : vector<8x128xf32> to vector<8x128xbf16>
    %c0_37 = arith.constant 0 : index
    %c0_38 = arith.constant 0 : index
    %c0_39 = arith.constant 0 : index
    %85 = vector.load %arg9[%c0_37, %c0_38, %c0_39] : memref<1x128x128xbf16, #tpu.memory_space<vmem>>, vector<1x128x128xbf16>
    %86 = vector.shape_cast %85 : vector<1x128x128xbf16> to vector<128x128xbf16>
    %cst_40 = arith.constant dense<0.000000e+00> : vector<8x128xf32>
    %87 = tpu.matmul %84, %86, %cst_40 {dimension_numbers = #tpu.dot_dimension_numbers<[1], [0], [0], [1], [0, 0, 1, 1], [], []>} : vector<8x128xbf16>, vector<128x128xbf16>, vector<8x128xf32> -> vector<8x128xf32>
    %88 = vector.broadcast %8 : vector<1x128xf32> to vector<8x128xf32>
    %89 = arith.addf %87, %88 : vector<8x128xf32>
    %cst_41 = arith.constant 0.000000e+00 : f32
    %90 = vector.broadcast %cst_41 : f32 to vector<8x128xf32>
    %91 = arith.maximumf %89, %90 : vector<8x128xf32>
    %92 = arith.truncf %91 : vector<8x128xf32> to vector<8x128xbf16>
    %c0_42 = arith.constant 0 : index
    %c0_43 = arith.constant 0 : index
    %c0_44 = arith.constant 0 : index
    %93 = vector.load %arg10[%c0_42, %c0_43, %c0_44] : memref<1x128x128xbf16, #tpu.memory_space<vmem>>, vector<1x128x128xbf16>
    %94 = vector.shape_cast %93 : vector<1x128x128xbf16> to vector<128x128xbf16>
    %cst_45 = arith.constant dense<0.000000e+00> : vector<8x128xf32>
    %95 = tpu.matmul %92, %94, %cst_45 {dimension_numbers = #tpu.dot_dimension_numbers<[1], [0], [0], [1], [0, 0, 1, 1], [], []>} : vector<8x128xbf16>, vector<128x128xbf16>, vector<8x128xf32> -> vector<8x128xf32>
    %96 = vector.broadcast %9 : vector<1x128xf32> to vector<8x128xf32>
    %97 = arith.addf %95, %96 : vector<8x128xf32>
    %98 = arith.addf %83, %97 : vector<8x128xf32>
    %cst_46 = arith.constant dense<0.000000e+00> : vector<8xf32>
    %99 = vector.multi_reduction <add>, %98, %cst_46 [1] : vector<8x128xf32> to vector<8xf32>
    %100 = vector.shape_cast %99 : vector<8xf32> to vector<8x1xf32>
    %cst_47 = arith.constant 3.125000e-02 : f32
    %101 = vector.broadcast %cst_47 : f32 to vector<8x1xf32>
    %102 = arith.mulf %100, %101 : vector<8x1xf32>
    %103 = arith.mulf %98, %98 : vector<8x128xf32>
    %cst_48 = arith.constant dense<0.000000e+00> : vector<8xf32>
    %104 = vector.multi_reduction <add>, %103, %cst_48 [1] : vector<8x128xf32> to vector<8xf32>
    %105 = vector.shape_cast %104 : vector<8xf32> to vector<8x1xf32>
    %cst_49 = arith.constant 3.125000e-02 : f32
    %106 = vector.broadcast %cst_49 : f32 to vector<8x1xf32>
    %107 = arith.mulf %105, %106 : vector<8x1xf32>
    %108 = arith.mulf %102, %102 : vector<8x1xf32>
    %109 = arith.subf %107, %108 : vector<8x1xf32>
    %cst_50 = arith.constant 0.000000e+00 : f32
    %110 = vector.broadcast %cst_50 : f32 to vector<8x1xf32>
    %111 = arith.maximumf %109, %110 : vector<8x1xf32>
    %112 = vector.broadcast %102 : vector<8x1xf32> to vector<8x128xf32>
    %113 = arith.subf %98, %112 : vector<8x128xf32>
    %cst_51 = arith.constant 9.99999974E-6 : f32
    %114 = vector.broadcast %cst_51 : f32 to vector<8x1xf32>
    %115 = arith.addf %111, %114 : vector<8x1xf32>
    %116 = math.rsqrt %115 : vector<8x1xf32>
    %117 = vector.broadcast %116 : vector<8x1xf32> to vector<8x128xf32>
    %118 = arith.mulf %113, %117 : vector<8x128xf32>
    %119 = vector.broadcast %12 : vector<1x128xf32> to vector<8x128xf32>
    %120 = arith.mulf %118, %119 : vector<8x128xf32>
    %121 = vector.broadcast %13 : vector<1x128xf32> to vector<8x128xf32>
    %122 = arith.addf %120, %121 : vector<8x128xf32>
    %c0_52 = arith.constant 0 : index
    %c0_53 = arith.constant 0 : index
    %123 = vector.load %arg16[%c0_52, %c0_53] : memref<8x128xf32, #tpu.memory_space<vmem>>, vector<8x128xf32>
    tpu.vector_store %arg16[%c0_52, %c0_53], %122 {strides = array<i32>} : memref<8x128xf32, #tpu.memory_space<vmem>>, vector<8x128xf32>,
    %c1_i32 = arith.constant 1 : i32
    %124 = arith.cmpi eq, %arg1, %c1_i32 : i32
    %125 = arith.extui %124 : i1 to i32
    %cst_54 = arith.constant 3.125000e-02 : f32
    %cst_55 = arith.constant 9.99999974E-6 : f32
    %c0_i32_56 = arith.constant 0 : i32
    %126 = arith.cmpi ne, %125, %c0_i32_56 : i32
    scf.if %126 {
      %c0_57 = arith.constant 0 : index
      %c0_58 = arith.constant 0 : index
      %127 = vector.load %arg16[%c0_57, %c0_58] : memref<8x128xf32, #tpu.memory_space<vmem>>, vector<8x128xf32>
      %cst_59 = arith.constant dense<0.000000e+00> : vector<8xf32>
      %128 = vector.multi_reduction <add>, %127, %cst_59 [1] : vector<8x128xf32> to vector<8xf32>
      %129 = vector.shape_cast %128 : vector<8xf32> to vector<8x1xf32>
      %130 = vector.broadcast %cst_54 : f32 to vector<8x1xf32>
      %131 = arith.mulf %129, %130 : vector<8x1xf32>
      %132 = arith.mulf %127, %127 : vector<8x128xf32>
      %cst_60 = arith.constant dense<0.000000e+00> : vector<8xf32>
      %133 = vector.multi_reduction <add>, %132, %cst_60 [1] : vector<8x128xf32> to vector<8xf32>
      %134 = vector.shape_cast %133 : vector<8xf32> to vector<8x1xf32>
      %135 = vector.broadcast %cst_54 : f32 to vector<8x1xf32>
      %136 = arith.mulf %134, %135 : vector<8x1xf32>
      %137 = arith.mulf %131, %131 : vector<8x1xf32>
      %138 = arith.subf %136, %137 : vector<8x1xf32>
      %cst_61 = arith.constant 0.000000e+00 : f32
      %139 = vector.broadcast %cst_61 : f32 to vector<8x1xf32>
      %140 = arith.maximumf %138, %139 : vector<8x1xf32>
      %141 = vector.broadcast %131 : vector<8x1xf32> to vector<8x128xf32>
      %142 = arith.subf %127, %141 : vector<8x128xf32>
      %143 = vector.broadcast %cst_55 : f32 to vector<8x1xf32>
      %144 = arith.addf %140, %143 : vector<8x1xf32>
      %145 = math.rsqrt %144 : vector<8x1xf32>
      %146 = vector.broadcast %145 : vector<8x1xf32> to vector<8x128xf32>
      %147 = arith.mulf %142, %146 : vector<8x128xf32>
      %c0_62 = arith.constant 0 : index
      %c0_63 = arith.constant 0 : index
      %148 = vector.load %arg12[%c0_62, %c0_63] : memref<2x128xf32, #tpu.memory_space<vmem>>, vector<1x128xf32>
      %149 = vector.broadcast %148 : vector<1x128xf32> to vector<8x128xf32>
      %150 = arith.mulf %147, %149 : vector<8x128xf32>
      %c1 = arith.constant 1 : index
      %c0_64 = arith.constant 0 : index
      %151 = vector.load %arg12[%c1, %c0_64] : memref<2x128xf32, #tpu.memory_space<vmem>>, vector<1x128xf32>
      %152 = vector.broadcast %151 : vector<1x128xf32> to vector<8x128xf32>
      %153 = arith.addf %150, %152 : vector<8x128xf32>
      %154 = arith.truncf %153 : vector<8x128xf32> to vector<8x128xbf16>
      %c0_65 = arith.constant 0 : index
      %c0_66 = arith.constant 0 : index
      %155 = vector.load %arg13[%c0_65, %c0_66] : memref<128x128xbf16, #tpu.memory_space<vmem>>, vector<128x128xbf16>
      %cst_67 = arith.constant dense<0.000000e+00> : vector<8x128xf32>
      %156 = tpu.matmul %154, %155, %cst_67 {dimension_numbers = #tpu.dot_dimension_numbers<[1], [0], [0], [1], [0, 0, 1, 1], [], []>} : vector<8x128xbf16>, vector<128x128xbf16>, vector<8x128xf32> -> vector<8x128xf32>
      %c0_68 = arith.constant 0 : index
      %c0_69 = arith.constant 0 : index
      %157 = vector.load %arg14[%c0_68, %c0_69] : memref<1x128xf32, #tpu.memory_space<vmem>>, vector<1x128xf32>
      %158 = vector.broadcast %157 : vector<1x128xf32> to vector<8x128xf32>
      %159 = arith.addf %156, %158 : vector<8x128xf32>
      %c0_70 = arith.constant 0 : index
      %c0_71 = arith.constant 0 : index
      %c0_72 = arith.constant 0 : index
      %160 = vector.load %arg15[%c0_70, %c0_71, %c0_72] : memref<1x8x128xf32, #tpu.memory_space<vmem>>, vector<1x8x128xf32>
      %161 = vector.shape_cast %160 : vector<1x8x128xf32> to vector<8x128xf32>
      %162 = vector.shape_cast %159 : vector<8x128xf32> to vector<1x8x128xf32>
      tpu.vector_store %arg15[%c0_70, %c0_71, %c0_72], %162 {strides = array<i32>} : memref<1x8x128xf32, #tpu.memory_space<vmem>>, vector<1x8x128xf32>,
    } else {
    }
    return
  }
  func.func @transform_0(%arg0: i32, %arg1: i32) -> (i32, i32, i32) {
    %c0_i32 = arith.constant 0 : i32
    %c0_i32_0 = arith.constant 0 : i32
    %c0_i32_1 = arith.constant 0 : i32
    return %arg0, %c0_i32, %c0_i32_0 : i32, i32, i32
  }
  func.func @transform_1(%arg0: i32, %arg1: i32) -> (i32, i32, i32) {
    %c0_i32 = arith.constant 0 : i32
    %c0_i32_0 = arith.constant 0 : i32
    %c0_i32_1 = arith.constant 0 : i32
    return %arg0, %c0_i32, %c0_i32_0 : i32, i32, i32
  }
  func.func @transform_2(%arg0: i32, %arg1: i32) -> (i32, i32, i32) {
    %c0_i32 = arith.constant 0 : i32
    %c0_i32_0 = arith.constant 0 : i32
    %c0_i32_1 = arith.constant 0 : i32
    return %arg0, %c0_i32, %c0_i32_0 : i32, i32, i32
  }
  func.func @transform_3(%arg0: i32, %arg1: i32) -> (i32, i32, i32) {
    %c0_i32 = arith.constant 0 : i32
    %c0_i32_0 = arith.constant 0 : i32
    %c0_i32_1 = arith.constant 0 : i32
    return %arg1, %c0_i32, %c0_i32_0 : i32, i32, i32
  }
  func.func @transform_4(%arg0: i32, %arg1: i32) -> (i32, i32, i32) {
    %c0_i32 = arith.constant 0 : i32
    %c0_i32_0 = arith.constant 0 : i32
    %c0_i32_1 = arith.constant 0 : i32
    return %arg1, %c0_i32, %c0_i32_0 : i32, i32, i32
  }
  func.func @transform_5(%arg0: i32, %arg1: i32) -> (i32, i32, i32) {
    %c0_i32 = arith.constant 0 : i32
    %c0_i32_0 = arith.constant 0 : i32
    %c0_i32_1 = arith.constant 0 : i32
    return %arg1, %c0_i32, %c0_i32_0 : i32, i32, i32
  }
  func.func @transform_6(%arg0: i32, %arg1: i32) -> (i32, i32, i32) {
    %c0_i32 = arith.constant 0 : i32
    %c0_i32_0 = arith.constant 0 : i32
    %c0_i32_1 = arith.constant 0 : i32
    return %arg1, %c0_i32, %c0_i32_0 : i32, i32, i32
  }
  func.func @transform_7(%arg0: i32, %arg1: i32) -> (i32, i32, i32) {
    %c0_i32 = arith.constant 0 : i32
    %c0_i32_0 = arith.constant 0 : i32
    %c0_i32_1 = arith.constant 0 : i32
    return %arg1, %c0_i32, %c0_i32_0 : i32, i32, i32
  }
  func.func @transform_8(%arg0: i32, %arg1: i32) -> (i32, i32, i32) {
    %c0_i32 = arith.constant 0 : i32
    %c0_i32_0 = arith.constant 0 : i32
    %c0_i32_1 = arith.constant 0 : i32
    return %arg1, %c0_i32, %c0_i32_0 : i32, i32, i32
  }
  func.func @transform_9(%arg0: i32, %arg1: i32) -> (i32, i32, i32) {
    %c0_i32 = arith.constant 0 : i32
    %c0_i32_0 = arith.constant 0 : i32
    %c0_i32_1 = arith.constant 0 : i32
    return %arg1, %c0_i32, %c0_i32_0 : i32, i32, i32
  }
  func.func @transform_10(%arg0: i32, %arg1: i32) -> (i32, i32) {
    %c0_i32 = arith.constant 0 : i32
    %c0_i32_0 = arith.constant 0 : i32
    %c0_i32_1 = arith.constant 0 : i32
    return %c0_i32, %c0_i32_0 : i32, i32
  }
  func.func @transform_11(%arg0: i32, %arg1: i32) -> (i32, i32) {
    %c0_i32 = arith.constant 0 : i32
    %c0_i32_0 = arith.constant 0 : i32
    %c0_i32_1 = arith.constant 0 : i32
    return %c0_i32, %c0_i32_0 : i32, i32
  }
  func.func @transform_12(%arg0: i32, %arg1: i32) -> (i32, i32) {
    %c0_i32 = arith.constant 0 : i32
    %c0_i32_0 = arith.constant 0 : i32
    %c0_i32_1 = arith.constant 0 : i32
    return %c0_i32, %c0_i32_0 : i32, i32
  }
  func.func @transform_13(%arg0: i32, %arg1: i32) -> (i32, i32, i32) {
    %c0_i32 = arith.constant 0 : i32
    %c0_i32_0 = arith.constant 0 : i32
    %c0_i32_1 = arith.constant 0 : i32
    return %arg0, %c0_i32, %c0_i32_0 : i32, i32, i32
  }
}

</mosaic_0001>

<llo_original>
// kernel: tpu_custom_call.1
$region0: #{tpu_custom_call.1}
  #allocation0 [shape = 'u32[]', space=smem, size = 0x4, offset = 0x4, fixed_abs, tag = 'smem constant byte address 0x4 - core index']
  #allocation1 [shape = 'u32[72,128]{1,0:T(1,128)}', space=vmem, size = 0x9000, scoped, tag = 'internal scratch']
  #allocation2 [shape = 'f32[8,128]{1,0:T(8,128)}', space=vmem, size = 0x1000, scoped, tag = 'scratch operand']
  %s0 = inlined_call_operand.hbm [shape: f32[2,8,128], index: 0, kind: input, shape index: {}]
  %s1 = inlined_call_operand.hbm [shape: bf16[2,128,128], index: 1, kind: input, shape index: {}]
  %s2 = inlined_call_operand.hbm [shape: bf16[2,128,128], index: 2, kind: input, shape index: {}]
  %s3 = inlined_call_operand.hbm [shape: bf16[2,128,128], index: 3, kind: input, shape index: {}]
  %s4 = inlined_call_operand.hbm [shape: bf16[2,128,128], index: 4, kind: input, shape index: {}]
  %s5 = inlined_call_operand.hbm [shape: bf16[2,128,128], index: 5, kind: input, shape index: {}]
  %s6 = inlined_call_operand.hbm [shape: bf16[2,128,128], index: 6, kind: input, shape index: {}]
  %s7 = inlined_call_operand.hbm [shape: bf16[2,128,128], index: 7, kind: input, shape index: {}]
  %s8 = inlined_call_operand.hbm [shape: bf16[2,128,128], index: 8, kind: input, shape index: {}]
  %s9 = inlined_call_operand.hbm [shape: f32[2,16,128], index: 9, kind: input, shape index: {}]
  %s10 = inlined_call_operand.vmem [shape: f32[2,128], index: 10, kind: input, shape index: {}]
  %s11 = inlined_call_operand.hbm [shape: bf16[128,128], index: 11, kind: input, shape index: {}]
  %s12 = inlined_call_operand.vmem [shape: f32[1,128], index: 12, kind: input, shape index: {}]
  %s13 = inlined_call_operand.hbm [shape: f32[2,8,128], index: 13, kind: output, shape index: {}]
  %s14 = sld [smem:[#allocation0]]
  $region137: #{tpu_custom_call.1} parent=0
    _
  %s16 = ssub.s32 1, %s14
  %s17 = scalar_select 0, %s16, %s14
  $region1: #{tpu_custom_call.1} parent=0
    #allocation3 [shape = 'u8[8192]{0}', space=vmem, size = 0x2000, scoped, tag = 'input window, operand 0']
    #allocation4 [shape = 's32[2]{0}', space=sflag, size = 0x8, scoped, tag = 'scoped memory for tpu_custom_call.1']
    #allocation5 [shape = 's32[2]{0}', space=sflag, size = 0x8, scoped, tag = 'scoped memory for tpu_custom_call.1']
    #allocation6 [shape = 'u8[65536]{0}', space=vmem, size = 0x10000, scoped, tag = 'input window, operand 1']
    #allocation7 [shape = 's32[2]{0}', space=sflag, size = 0x8, scoped, tag = 'scoped memory for tpu_custom_call.1']
    #allocation8 [shape = 'u8[65536]{0}', space=vmem, size = 0x10000, scoped, tag = 'input window, operand 2']
    #allocation9 [shape = 'u8[65536]{0}', space=vmem, size = 0x10000, scoped, tag = 'input window, operand 3']
    #allocation10 [shape = 's32[2]{0}', space=sflag, size = 0x8, scoped, tag = 'scoped memory for tpu_custom_call.1']
    #allocation11 [shape = 'u8[65536]{0}', space=vmem, size = 0x10000, scoped, tag = 'input window, operand 4']
    #allocation12 [shape = 'u8[65536]{0}', space=vmem, size = 0x10000, scoped, tag = 'input window, operand 5']
    #allocation13 [shape = 's32[2]{0}', space=sflag, size = 0x8, scoped, tag = 'scoped memory for tpu_custom_call.1']
    #allocation14 [shape = 'u8[65536]{0}', space=vmem, size = 0x10000, scoped, tag = 'input window, operand 6']
    #allocation15 [shape = 'u8[65536]{0}', space=vmem, size = 0x10000, scoped, tag = 'input window, operand 7']
    #allocation16 [shape = 's32[2]{0}', space=sflag, size = 0x8, scoped, tag = 'scoped memory for tpu_custom_call.1']
    #allocation17 [shape = 'u8[65536]{0}', space=vmem, size = 0x10000, scoped, tag = 'input window, operand 8']
    #allocation18 [shape = 'u8[16384]{0}', space=vmem, size = 0x4000, scoped, tag = 'input window, operand 9']
    #allocation19 [shape = 's32[2]{0}', space=sflag, size = 0x8, scoped, tag = 'scoped memory for tpu_custom_call.1']
    #allocation20 [shape = 'u8[32768]{0}', space=vmem, size = 0x8000, scoped, tag = 'input window, operand 11, single buffered']
    #allocation21 [shape = 'u8[8192]{0}', space=vmem, size = 0x2000, scoped, tag = 'output window, operand 0']
    %18 = vsyncpa [#allocation4], 0
    %s19 = scalar_lea.sflag [#allocation4], 1
    %20 = vsyncpa %s19, 0
    %21 = vsyncpa [#allocation7], 0
    %s22 = scalar_lea.sflag [#allocation7], 1
    %23 = vsyncpa %s22, 0
    %24 = vsyncpa [#allocation10], 0
    %s25 = scalar_lea.sflag [#allocation10], 1
    %26 = vsyncpa %s25, 0
    %27 = vsyncpa [#allocation13], 0
    %s28 = scalar_lea.sflag [#allocation13], 1
    %29 = vsyncpa %s28, 0
    %30 = vsyncpa [#allocation16], 0
    %s31 = scalar_lea.sflag [#allocation16], 1
    %32 = vsyncpa %s31, 0
    %33 = vsyncpa [#allocation19], 0
    %s34 = scalar_lea.sflag [#allocation19], 1
    %35 = vsyncpa %s34, 0
    %36 = vsyncpa [#allocation5], 0
    %s37 = scalar_lea.sflag [#allocation5], 1
    %38 = vsyncpa %s37, 0
    loop: start=0, step=1, limit=6
    $region2: #{tpu_custom_call.1} parent=1 // loop_pre_header
      _
    $region3: #{tpu_custom_call.1} parent=1 // loop_header
      %s40 = sphi 0, %s44
      %p41 = scmp.ge.s32.totalorder %s40, 6
      %s47 = sphi 0, %s59
      %s48 = sphi 0, %s55
      %s49 = sphi 0, %s47
      %s50 = sphi 0, %s48
      %s51 = sphi 0, %s49
      %s52 = sphi 0, %s50
      %s62 = sphi 0, %s64
      %s65 = sphi 0, %s62
      %s66 = sphi 0, %s65
      %s82 = sphi 0, %s66
      %s88 = sphi 0, %s90
      %s91 = sphi 0, %s88
      %s92 = sphi 0, %s91
      %s108 = sphi 0, %s92
      %s114 = sphi 0, %s116
      %s117 = sphi 0, %s114
      %s118 = sphi 0, %s117
      %s134 = sphi 0, %s118
      %s140 = sphi 0, %s142
      %s143 = sphi 0, %s140
      %s144 = sphi 0, %s143
      %s160 = sphi 0, %s144
      %s166 = sphi 0, %s168
      %s169 = sphi 0, %s166
      %s170 = sphi 0, %s169
      %s186 = sphi 0, %s170
      %s192 = sphi 0, %s194
      %s195 = sphi 0, %s192
      %s196 = sphi 0, %s195
      %s212 = sphi 0, %s196
      %s218 = sphi 0, %s220
      %s221 = sphi 0, %s218
      %s222 = sphi 0, %s221
      %s238 = sphi 0, %s222
      %s244 = sphi 0, %s246
      %s247 = sphi 0, %s244
      %s248 = sphi 0, %s247
      %s264 = sphi 0, %s248
      %s270 = sphi 0, %s272
      %s273 = sphi 0, %s270
      %s274 = sphi 0, %s273
      %s290 = sphi 0, %s274
      %s296 = sphi 0, %s298
      %s299 = sphi 0, %s296
      %s300 = sphi 0, %s299
      %s316 = sphi 0, %s300
      %s320 = sphi 0, %s320
      %s322 = sphi 0, %s320
      %s323 = sphi 0, %s322
      %s337 = sphi 0, %s323
      %s341 = sphi 0, %s341
      %s343 = sphi 0, %s341
      %s344 = sphi 0, %s343
      %s358 = sphi 0, %s344
      %s362 = sphi 0, %s362
      %s364 = sphi 0, %s362
      %s365 = sphi 0, %s364
      %s379 = sphi 0, %s365
      %s385 = sphi 0, %s387
      %s388 = sphi 0, %s385
      %s389 = sphi 0, %s388
      %s405 = sphi 0, %s389
    $region4: #{tpu_custom_call.1} parent=1 // loop_header_branch
      %43 = sbr.rel (%p41) target = $region8
    $region5: #{tpu_custom_call.1} parent=1 // loop_body
      %s45 = ssub.s32 %s40, 1
      %s46 = ssub.s32 %s40, 2
      %s53 = sadd.s32 1, %s48
      %p54 = scmp.ge.s32.totalorder %s53, 2
      %s55 = scalar_select %p54, 0, %s53
      %s56 = sadd.s32 1, %s47
      %s57 = scalar_select %p54, %s56, %s47
      %p58 = scmp.ge.s32.totalorder %s57, 2
      %s59 = scalar_select %p58, 0, %s57
      %s60 = ssub.s32 %s47, %s59
      %p61 = scmp.eq.s32.totalorder %s60, 0
      %s63 = sadd.s32 %s62, 1
      %s64 = scalar_select %p61, %s62, %s63
      %p67 = pneg %p61
      %p68 = scmp.eq.s32.totalorder %s40, 3
      %p69 = por %p67, %p68
      %p70 = scmp.ne.s32.totalorder %s62, %s65
      %p71 = scmp.eq.s32.totalorder %s40, 0
      %p72 = por %p70, %p71
      %p73 = scmp.ne.s32.totalorder %s62, %s65
      %p74 = scmp.eq.s32.totalorder %s45, 3
      %p75 = por %p73, %p74
      %p76 = scmp.ne.s32.totalorder %s65, %s66
      %p77 = scmp.eq.s32.totalorder %s45, 0
      %p78 = por %p76, %p77
      %p79 = scmp.ne.s32.totalorder %s65, %s66
      %p80 = scmp.eq.s32.totalorder %s46, 3
      %p81 = por %p79, %p80
      %p83 = scmp.ne.s32.totalorder %s66, %s82
      %p84 = scmp.eq.s32.totalorder %s46, 0
      %p85 = por %p83, %p84
      %s86 = ssub.s32 %s47, %s59
      %p87 = scmp.eq.s32.totalorder %s86, 0
      %s89 = sadd.s32 %s88, 1
      %s90 = scalar_select %p87, %s88, %s89
      %p93 = pneg %p87
      %p94 = scmp.eq.s32.totalorder %s40, 3
      %p95 = por %p93, %p94
      %p96 = scmp.ne.s32.totalorder %s88, %s91
      %p97 = scmp.eq.s32.totalorder %s40, 0
      %p98 = por %p96, %p97
      %p99 = scmp.ne.s32.totalorder %s88, %s91
      %p100 = scmp.eq.s32.totalorder %s45, 3
      %p101 = por %p99, %p100
      %p102 = scmp.ne.s32.totalorder %s91, %s92
      %p103 = scmp.eq.s32.totalorder %s45, 0
      %p104 = por %p102, %p103
      %p105 = scmp.ne.s32.totalorder %s91, %s92
      %p106 = scmp.eq.s32.totalorder %s46, 3
      %p107 = por %p105, %p106
      %p109 = scmp.ne.s32.totalorder %s92, %s108
      %p110 = scmp.eq.s32.totalorder %s46, 0
      %p111 = por %p109, %p110
      %s112 = ssub.s32 %s47, %s59
      %p113 = scmp.eq.s32.totalorder %s112, 0
      %s115 = sadd.s32 %s114, 1
      %s116 = scalar_select %p113, %s114, %s115
      %p119 = pneg %p113
      %p120 = scmp.eq.s32.totalorder %s40, 3
      %p121 = por %p119, %p120
      %p122 = scmp.ne.s32.totalorder %s114, %s117
      %p123 = scmp.eq.s32.totalorder %s40, 0
      %p124 = por %p122, %p123
      %p125 = scmp.ne.s32.totalorder %s114, %s117
      %p126 = scmp.eq.s32.totalorder %s45, 3
      %p127 = por %p125, %p126
      %p128 = scmp.ne.s32.totalorder %s117, %s118
      %p129 = scmp.eq.s32.totalorder %s45, 0
      %p130 = por %p128, %p129
      %p131 = scmp.ne.s32.totalorder %s117, %s118
      %p132 = scmp.eq.s32.totalorder %s46, 3
      %p133 = por %p131, %p132
      %p135 = scmp.ne.s32.totalorder %s118, %s134
      %p136 = scmp.eq.s32.totalorder %s46, 0
      %p137 = por %p135, %p136
      %s138 = ssub.s32 %s48, %s55
      %p139 = scmp.eq.s32.totalorder %s138, 0
      %s141 = sadd.s32 %s140, 1
      %s142 = scalar_select %p139, %s140, %s141
      %p145 = pneg %p139
      %p146 = scmp.eq.s32.totalorder %s40, 3
      %p147 = por %p145, %p146
      %p148 = scmp.ne.s32.totalorder %s140, %s143
      %p149 = scmp.eq.s32.totalorder %s40, 0
      %p150 = por %p148, %p149
      %p151 = scmp.ne.s32.totalorder %s140, %s143
      %p152 = scmp.eq.s32.totalorder %s45, 3
      %p153 = por %p151, %p152
      %p154 = scmp.ne.s32.totalorder %s143, %s144
      %p155 = scmp.eq.s32.totalorder %s45, 0
      %p156 = por %p154, %p155
      %p157 = scmp.ne.s32.totalorder %s143, %s144
      %p158 = scmp.eq.s32.totalorder %s46, 3
      %p159 = por %p157, %p158
      %p161 = scmp.ne.s32.totalorder %s144, %s160
      %p162 = scmp.eq.s32.totalorder %s46, 0
      %p163 = por %p161, %p162
      %s164 = ssub.s32 %s48, %s55
      %p165 = scmp.eq.s32.totalorder %s164, 0
      %s167 = sadd.s32 %s166, 1
      %s168 = scalar_select %p165, %s166, %s167
      %p171 = pneg %p165
      %p172 = scmp.eq.s32.totalorder %s40, 3
      %p173 = por %p171, %p172
      %p174 = scmp.ne.s32.totalorder %s166, %s169
      %p175 = scmp.eq.s32.totalorder %s40, 0
      %p176 = por %p174, %p175
      %p177 = scmp.ne.s32.totalorder %s166, %s169
      %p178 = scmp.eq.s32.totalorder %s45, 3
      %p179 = por %p177, %p178
      %p180 = scmp.ne.s32.totalorder %s169, %s170
      %p181 = scmp.eq.s32.totalorder %s45, 0
      %p182 = por %p180, %p181
      %p183 = scmp.ne.s32.totalorder %s169, %s170
      %p184 = scmp.eq.s32.totalorder %s46, 3
      %p185 = por %p183, %p184
      %p187 = scmp.ne.s32.totalorder %s170, %s186
      %p188 = scmp.eq.s32.totalorder %s46, 0
      %p189 = por %p187, %p188
      %s190 = ssub.s32 %s48, %s55
      %p191 = scmp.eq.s32.totalorder %s190, 0
      %s193 = sadd.s32 %s192, 1
      %s194 = scalar_select %p191, %s192, %s193
      %p197 = pneg %p191
      %p198 = scmp.eq.s32.totalorder %s40, 3
      %p199 = por %p197, %p198
      %p200 = scmp.ne.s32.totalorder %s192, %s195
      %p201 = scmp.eq.s32.totalorder %s40, 0
      %p202 = por %p200, %p201
      %p203 = scmp.ne.s32.totalorder %s192, %s195
      %p204 = scmp.eq.s32.totalorder %s45, 3
      %p205 = por %p203, %p204
      %p206 = scmp.ne.s32.totalorder %s195, %s196
      %p207 = scmp.eq.s32.totalorder %s45, 0
      %p208 = por %p206, %p207
      %p209 = scmp.ne.s32.totalorder %s195, %s196
      %p210 = scmp.eq.s32.totalorder %s46, 3
      %p211 = por %p209, %p210
      %p213 = scmp.ne.s32.totalorder %s196, %s212
      %p214 = scmp.eq.s32.totalorder %s46, 0
      %p215 = por %p213, %p214
      %s216 = ssub.s32 %s48, %s55
      %p217 = scmp.eq.s32.totalorder %s216, 0
      %s219 = sadd.s32 %s218, 1
      %s220 = scalar_select %p217, %s218, %s219
      %p223 = pneg %p217
      %p224 = scmp.eq.s32.totalorder %s40, 3
      %p225 = por %p223, %p224
      %p226 = scmp.ne.s32.totalorder %s218, %s221
      %p227 = scmp.eq.s32.totalorder %s40, 0
      %p228 = por %p226, %p227
      %p229 = scmp.ne.s32.totalorder %s218, %s221
      %p230 = scmp.eq.s32.totalorder %s45, 3
      %p231 = por %p229, %p230
      %p232 = scmp.ne.s32.totalorder %s221, %s222
      %p233 = scmp.eq.s32.totalorder %s45, 0
      %p234 = por %p232, %p233
      %p235 = scmp.ne.s32.totalorder %s221, %s222
      %p236 = scmp.eq.s32.totalorder %s46, 3
      %p237 = por %p235, %p236
      %p239 = scmp.ne.s32.totalorder %s222, %s238
      %p240 = scmp.eq.s32.totalorder %s46, 0
      %p241 = por %p239, %p240
      %s242 = ssub.s32 %s48, %s55
      %p243 = scmp.eq.s32.totalorder %s242, 0
      %s245 = sadd.s32 %s244, 1
      %s246 = scalar_select %p243, %s244, %s245
      %p249 = pneg %p243
      %p250 = scmp.eq.s32.totalorder %s40, 3
      %p251 = por %p249, %p250
      %p252 = scmp.ne.s32.totalorder %s244, %s247
      %p253 = scmp.eq.s32.totalorder %s40, 0
      %p254 = por %p252, %p253
      %p255 = scmp.ne.s32.totalorder %s244, %s247
      %p256 = scmp.eq.s32.totalorder %s45, 3
      %p257 = por %p255, %p256
      %p258 = scmp.ne.s32.totalorder %s247, %s248
      %p259 = scmp.eq.s32.totalorder %s45, 0
      %p260 = por %p258, %p259
      %p261 = scmp.ne.s32.totalorder %s247, %s248
      %p262 = scmp.eq.s32.totalorder %s46, 3
      %p263 = por %p261, %p262
      %p265 = scmp.ne.s32.totalorder %s248, %s264
      %p266 = scmp.eq.s32.totalorder %s46, 0
      %p267 = por %p265, %p266
      %s268 = ssub.s32 %s48, %s55
      %p269 = scmp.eq.s32.totalorder %s268, 0
      %s271 = sadd.s32 %s270, 1
      %s272 = scalar_select %p269, %s270, %s271
      %p275 = pneg %p269
      %p276 = scmp.eq.s32.totalorder %s40, 3
      %p277 = por %p275, %p276
      %p278 = scmp.ne.s32.totalorder %s270, %s273
      %p279 = scmp.eq.s32.totalorder %s40, 0
      %p280 = por %p278, %p279
      %p281 = scmp.ne.s32.totalorder %s270, %s273
      %p282 = scmp.eq.s32.totalorder %s45, 3
      %p283 = por %p281, %p282
      %p284 = scmp.ne.s32.totalorder %s273, %s274
      %p285 = scmp.eq.s32.totalorder %s45, 0
      %p286 = por %p284, %p285
      %p287 = scmp.ne.s32.totalorder %s273, %s274
      %p288 = scmp.eq.s32.totalorder %s46, 3
      %p289 = por %p287, %p288
      %p291 = scmp.ne.s32.totalorder %s274, %s290
      %p292 = scmp.eq.s32.totalorder %s46, 0
      %p293 = por %p291, %p292
      %s294 = ssub.s32 %s48, %s55
      %p295 = scmp.eq.s32.totalorder %s294, 0
      %s297 = sadd.s32 %s296, 1
      %s298 = scalar_select %p295, %s296, %s297
      %p301 = pneg %p295
      %p302 = scmp.eq.s32.totalorder %s40, 3
      %p303 = por %p301, %p302
      %p304 = scmp.ne.s32.totalorder %s296, %s299
      %p305 = scmp.eq.s32.totalorder %s40, 0
      %p306 = por %p304, %p305
      %p307 = scmp.ne.s32.totalorder %s296, %s299
      %p308 = scmp.eq.s32.totalorder %s45, 3
      %p309 = por %p307, %p308
      %p310 = scmp.ne.s32.totalorder %s299, %s300
      %p311 = scmp.eq.s32.totalorder %s45, 0
      %p312 = por %p310, %p311
      %p313 = scmp.ne.s32.totalorder %s299, %s300
      %p314 = scmp.eq.s32.totalorder %s46, 3
      %p315 = por %p313, %p314
      %p317 = scmp.ne.s32.totalorder %s300, %s316
      %p318 = scmp.eq.s32.totalorder %s46, 0
      %p319 = por %p317, %p318
      %s321 = sadd.s32 %s320, 1
      %p324 = scmp.eq.s32.totalorder %s40, 3
      %p325 = scmp.ne.s32.totalorder %s320, %s322
      %p326 = scmp.eq.s32.totalorder %s40, 0
      %p327 = por %p325, %p326
      %p328 = scmp.ne.s32.totalorder %s320, %s322
      %p329 = scmp.eq.s32.totalorder %s45, 3
      %p330 = por %p328, %p329
      %p331 = scmp.ne.s32.totalorder %s322, %s323
      %p332 = scmp.eq.s32.totalorder %s45, 0
      %p333 = por %p331, %p332
      %p334 = scmp.ne.s32.totalorder %s322, %s323
      %p335 = scmp.eq.s32.totalorder %s46, 3
      %p336 = por %p334, %p335
      %p338 = scmp.ne.s32.totalorder %s323, %s337
      %p339 = scmp.eq.s32.totalorder %s46, 0
      %p340 = por %p338, %p339
      %s342 = sadd.s32 %s341, 1
      %p345 = scmp.eq.s32.totalorder %s40, 3
      %p346 = scmp.ne.s32.totalorder %s341, %s343
      %p347 = scmp.eq.s32.totalorder %s40, 0
      %p348 = por %p346, %p347
      %p349 = scmp.ne.s32.totalorder %s341, %s343
      %p350 = scmp.eq.s32.totalorder %s45, 3
      %p351 = por %p349, %p350
      %p352 = scmp.ne.s32.totalorder %s343, %s344
      %p353 = scmp.eq.s32.totalorder %s45, 0
      %p354 = por %p352, %p353
      %p355 = scmp.ne.s32.totalorder %s343, %s344
      %p356 = scmp.eq.s32.totalorder %s46, 3
      %p357 = por %p355, %p356
      %p359 = scmp.ne.s32.totalorder %s344, %s358
      %p360 = scmp.eq.s32.totalorder %s46, 0
      %p361 = por %p359, %p360
      %s363 = sadd.s32 %s362, 1
      %p366 = scmp.eq.s32.totalorder %s40, 3
      %p367 = scmp.ne.s32.totalorder %s362, %s364
      %p368 = scmp.eq.s32.totalorder %s40, 0
      %p369 = por %p367, %p368
      %p370 = scmp.ne.s32.totalorder %s362, %s364
      %p371 = scmp.eq.s32.totalorder %s45, 3
      %p372 = por %p370, %p371
      %p373 = scmp.ne.s32.totalorder %s364, %s365
      %p374 = scmp.eq.s32.totalorder %s45, 0
      %p375 = por %p373, %p374
      %p376 = scmp.ne.s32.totalorder %s364, %s365
      %p377 = scmp.eq.s32.totalorder %s46, 3
      %p378 = por %p376, %p377
      %p380 = scmp.ne.s32.totalorder %s365, %s379
      %p381 = scmp.eq.s32.totalorder %s46, 0
      %p382 = por %p380, %p381
      %s383 = ssub.s32 %s47, %s59
      %p384 = scmp.eq.s32.totalorder %s383, 0
      %s386 = sadd.s32 %s385, 1
      %s387 = scalar_select %p384, %s385, %s386
      %p390 = pneg %p384
      %p391 = scmp.eq.s32.totalorder %s40, 3
      %p392 = por %p390, %p391
      %p393 = scmp.ne.s32.totalorder %s385, %s388
      %p394 = scmp.eq.s32.totalorder %s40, 0
      %p395 = por %p393, %p394
      %p396 = scmp.ne.s32.totalorder %s385, %s388
      %p397 = scmp.eq.s32.totalorder %s45, 3
      %p398 = por %p396, %p397
      %p399 = scmp.ne.s32.totalorder %s388, %s389
      %p400 = scmp.eq.s32.totalorder %s45, 0
      %p401 = por %p399, %p400
      %p402 = scmp.ne.s32.totalorder %s388, %s389
      %p403 = scmp.eq.s32.totalorder %s46, 3
      %p404 = por %p402, %p403
      %p406 = scmp.ne.s32.totalorder %s389, %s405
      %p407 = scmp.eq.s32.totalorder %s46, 0
      %p408 = por %p406, %p407
      %p409 = scmp.le.s32.totalorder 1, %s40
      %p410 = scmp.lt.s32.totalorder %s40, 5
      %p411 = pnand %p409, %p410
      %p412 = pneg %p411
      // Predicated region
      $region9: #{tpu_custom_call.1} parent=5 // pred_check
        _
      $region10: #{tpu_custom_call.1} parent=5 // pred_check_branch
        %414 = sbr.rel (%p411) target = $region12
      $region11: #{tpu_custom_call.1} parent=5 // pred_region
        %s415 = ssub.s32 %s40, 1
        // Predicated region
        $region13: #{tpu_custom_call.1} parent=11 // pred_check
          %p416 = pneg %p333
        $region14: #{tpu_custom_call.1} parent=11 // pred_check_branch
          %418 = sbr.rel (%p416) target = $region16
        $region15: #{tpu_custom_call.1} parent=11 // pred_region
          _
        $region16: #{tpu_custom_call.1} parent=11 // pred_fallthru
          _
        // Predicated region
        $region17: #{tpu_custom_call.1} parent=11 // pred_check
          %p419 = pneg %p354
        $region18: #{tpu_custom_call.1} parent=11 // pred_check_branch
          %421 = sbr.rel (%p419) target = $region20
        $region19: #{tpu_custom_call.1} parent=11 // pred_region
          %423 = vsyncadd [#allocation19], 0
          %s424 = sshll.u32 %s11, 4
          %s425 = int_to_ptr.hbm [resolvable:$true] %s424
          %s426 = sshll.u32 [#allocation20], 4
          %s427 = int_to_ptr.vmem [resolvable:$true] %s426
          %432 = dma.hbm_to_vmem [thread:$0]  %s425, 1024, %s427, [#allocation19], 64, 64, 4
        $region20: #{tpu_custom_call.1} parent=11 // pred_fallthru
          _
        // Predicated region
        $region21: #{tpu_custom_call.1} parent=11 // pred_check
          %p433 = pneg %p375
        $region22: #{tpu_custom_call.1} parent=11 // pred_check_branch
          %435 = sbr.rel (%p433) target = $region24
        $region23: #{tpu_custom_call.1} parent=11 // pred_region
          _
        $region24: #{tpu_custom_call.1} parent=11 // pred_fallthru
          _
      $region12: #{tpu_custom_call.1} parent=5 // pred_fallthru
        _
      %p436 = scmp.lt.s32.totalorder %s40, 4
      // Predicated region
      $region25: #{tpu_custom_call.1} parent=5 // pred_check
        %p437 = pneg %p436
      $region26: #{tpu_custom_call.1} parent=5 // pred_check_branch
        %439 = sbr.rel (%p437) target = $region28
      $region27: #{tpu_custom_call.1} parent=5 // pred_region
        // Predicated region
        $region29: #{tpu_custom_call.1} parent=27 // pred_check
          %p440 = pneg %p72
        $region30: #{tpu_custom_call.1} parent=27 // pred_check_branch
          %442 = sbr.rel (%p440) target = $region32
        $region31: #{tpu_custom_call.1} parent=27 // pred_region
          %s443 = sand.u32 %s62, 1
          %s444 = scalar_lea.sflag [#allocation4], %s443
          %s445 = sand.u32 %s62, 1
          %s446 = smul.addr %s445, 8
          %s447 = scalar_lea.vmem [#allocation3], %s446
          %449 = vsyncadd %s444, 0
          %s450 = smul.addr %s47, 8
          %s451 = scalar_lea.hbm %s0, %s450
          %s453 = sshll.u32 %s451, 4
          %s454 = int_to_ptr.hbm [resolvable:$true] %s453
          %s455 = sshll.u32 %s447, 4
          %s456 = int_to_ptr.vmem [resolvable:$true] %s455
          %458 = dma.hbm_to_vmem [thread:$0]  %s454, 128, %s456, %s444
        $region32: #{tpu_custom_call.1} parent=27 // pred_fallthru
          _
        // Predicated region
        $region33: #{tpu_custom_call.1} parent=27 // pred_check
          %p459 = pneg %p98
        $region34: #{tpu_custom_call.1} parent=27 // pred_check_branch
          %461 = sbr.rel (%p459) target = $region36
        $region35: #{tpu_custom_call.1} parent=27 // pred_region
          %s462 = sand.u32 %s40, 1
          %s463 = scalar_lea.sflag [#allocation7], %s462
          %s464 = sand.u32 %s88, 1
          %s465 = smul.addr %s464, 64
          %s466 = scalar_lea.vmem [#allocation6], %s465
          %468 = vsyncadd %s463, 0
          %s469 = smul.addr %s47, 16
          %s470 = smul.addr %s469, 4
          %s471 = scalar_lea.hbm %s1, %s470
          %s472 = sshll.u32 %s471, 4
          %s473 = int_to_ptr.hbm [resolvable:$true] %s472
          %s474 = sshll.u32 %s466, 4
          %s475 = int_to_ptr.vmem [resolvable:$true] %s474
          %480 = dma.hbm_to_vmem [thread:$0]  %s473, 1024, %s475, %s463, 64, 64, 4
        $region36: #{tpu_custom_call.1} parent=27 // pred_fallthru
          _
        // Predicated region
        $region37: #{tpu_custom_call.1} parent=27 // pred_check
          %p481 = pneg %p124
        $region38: #{tpu_custom_call.1} parent=27 // pred_check_branch
          %483 = sbr.rel (%p481) target = $region40
        $region39: #{tpu_custom_call.1} parent=27 // pred_region
          %s484 = sand.u32 %s40, 1
          %s485 = scalar_lea.sflag [#allocation7], %s484
          %s486 = sand.u32 %s114, 1
          %s487 = smul.addr %s486, 64
          %s488 = scalar_lea.vmem [#allocation8], %s487
          %490 = vsyncadd %s485, 0
          %s491 = smul.addr %s47, 16
          %s492 = smul.addr %s491, 4
          %s493 = scalar_lea.hbm %s2, %s492
          %s494 = sshll.u32 %s493, 4
          %s495 = int_to_ptr.hbm [resolvable:$true] %s494
          %s496 = sshll.u32 %s488, 4
          %s497 = int_to_ptr.vmem [resolvable:$true] %s496
          %502 = dma.hbm_to_vmem [thread:$0]  %s495, 1024, %s497, %s485, 64, 64, 4
        $region40: #{tpu_custom_call.1} parent=27 // pred_fallthru
          _
        // Predicated region
        $region41: #{tpu_custom_call.1} parent=27 // pred_check
          %p503 = pneg %p150
        $region42: #{tpu_custom_call.1} parent=27 // pred_check_branch
          %505 = sbr.rel (%p503) target = $region44
        $region43: #{tpu_custom_call.1} parent=27 // pred_region
          %s506 = sand.u32 %s40, 1
          %s507 = scalar_lea.sflag [#allocation10], %s506
          %s508 = sand.u32 %s140, 1
          %s509 = smul.addr %s508, 64
          %s510 = scalar_lea.vmem [#allocation9], %s509
          %512 = vsyncadd %s507, 0
          %s513 = smul.addr %s48, 16
          %s514 = smul.addr %s513, 4
          %s515 = scalar_lea.hbm %s3, %s514
          %s516 = sshll.u32 %s515, 4
          %s517 = int_to_ptr.hbm [resolvable:$true] %s516
          %s518 = sshll.u32 %s510, 4
          %s519 = int_to_ptr.vmem [resolvable:$true] %s518
          %524 = dma.hbm_to_vmem [thread:$0]  %s517, 1024, %s519, %s507, 64, 64, 4
        $region44: #{tpu_custom_call.1} parent=27 // pred_fallthru
          _
        // Predicated region
        $region45: #{tpu_custom_call.1} parent=27 // pred_check
          %p525 = pneg %p176
        $region46: #{tpu_custom_call.1} parent=27 // pred_check_branch
          %527 = sbr.rel (%p525) target = $region48
        $region47: #{tpu_custom_call.1} parent=27 // pred_region
          %s528 = sand.u32 %s40, 1
          %s529 = scalar_lea.sflag [#allocation10], %s528
          %s530 = sand.u32 %s166, 1
          %s531 = smul.addr %s530, 64
          %s532 = scalar_lea.vmem [#allocation11], %s531
          %534 = vsyncadd %s529, 0
          %s535 = smul.addr %s48, 16
          %s536 = smul.addr %s535, 4
          %s537 = scalar_lea.hbm %s4, %s536
          %s538 = sshll.u32 %s537, 4
          %s539 = int_to_ptr.hbm [resolvable:$true] %s538
          %s540 = sshll.u32 %s532, 4
          %s541 = int_to_ptr.vmem [resolvable:$true] %s540
          %546 = dma.hbm_to_vmem [thread:$0]  %s539, 1024, %s541, %s529, 64, 64, 4
        $region48: #{tpu_custom_call.1} parent=27 // pred_fallthru
          _
        // Predicated region
        $region49: #{tpu_custom_call.1} parent=27 // pred_check
          %p547 = pneg %p202
        $region50: #{tpu_custom_call.1} parent=27 // pred_check_branch
          %549 = sbr.rel (%p547) target = $region52
        $region51: #{tpu_custom_call.1} parent=27 // pred_region
          %s550 = sand.u32 %s40, 1
          %s551 = scalar_lea.sflag [#allocation13], %s550
          %s552 = sand.u32 %s192, 1
          %s553 = smul.addr %s552, 64
          %s554 = scalar_lea.vmem [#allocation12], %s553
          %556 = vsyncadd %s551, 0
          %s557 = smul.addr %s48, 16
          %s558 = smul.addr %s557, 4
          %s559 = scalar_lea.hbm %s5, %s558
          %s560 = sshll.u32 %s559, 4
          %s561 = int_to_ptr.hbm [resolvable:$true] %s560
          %s562 = sshll.u32 %s554, 4
          %s563 = int_to_ptr.vmem [resolvable:$true] %s562
          %568 = dma.hbm_to_vmem [thread:$0]  %s561, 1024, %s563, %s551, 64, 64, 4
        $region52: #{tpu_custom_call.1} parent=27 // pred_fallthru
          _
        // Predicated region
        $region53: #{tpu_custom_call.1} parent=27 // pred_check
          %p569 = pneg %p228
        $region54: #{tpu_custom_call.1} parent=27 // pred_check_branch
          %571 = sbr.rel (%p569) target = $region56
        $region55: #{tpu_custom_call.1} parent=27 // pred_region
          %s572 = sand.u32 %s40, 1
          %s573 = scalar_lea.sflag [#allocation13], %s572
          %s574 = sand.u32 %s218, 1
          %s575 = smul.addr %s574, 64
          %s576 = scalar_lea.vmem [#allocation14], %s575
          %578 = vsyncadd %s573, 0
          %s579 = smul.addr %s48, 16
          %s580 = smul.addr %s579, 4
          %s581 = scalar_lea.hbm %s6, %s580
          %s582 = sshll.u32 %s581, 4
          %s583 = int_to_ptr.hbm [resolvable:$true] %s582
          %s584 = sshll.u32 %s576, 4
          %s585 = int_to_ptr.vmem [resolvable:$true] %s584
          %590 = dma.hbm_to_vmem [thread:$0]  %s583, 1024, %s585, %s573, 64, 64, 4
        $region56: #{tpu_custom_call.1} parent=27 // pred_fallthru
          _
        // Predicated region
        $region57: #{tpu_custom_call.1} parent=27 // pred_check
          %p591 = pneg %p254
        $region58: #{tpu_custom_call.1} parent=27 // pred_check_branch
          %593 = sbr.rel (%p591) target = $region60
        $region59: #{tpu_custom_call.1} parent=27 // pred_region
          %s594 = sand.u32 %s40, 1
          %s595 = scalar_lea.sflag [#allocation16], %s594
          %s596 = sand.u32 %s244, 1
          %s597 = smul.addr %s596, 64
          %s598 = scalar_lea.vmem [#allocation15], %s597
          %600 = vsyncadd %s595, 0
          %s601 = smul.addr %s48, 16
          %s602 = smul.addr %s601, 4
          %s603 = scalar_lea.hbm %s7, %s602
          %s604 = sshll.u32 %s603, 4
          %s605 = int_to_ptr.hbm [resolvable:$true] %s604
          %s606 = sshll.u32 %s598, 4
          %s607 = int_to_ptr.vmem [resolvable:$true] %s606
          %612 = dma.hbm_to_vmem [thread:$0]  %s605, 1024, %s607, %s595, 64, 64, 4
        $region60: #{tpu_custom_call.1} parent=27 // pred_fallthru
          _
        // Predicated region
        $region61: #{tpu_custom_call.1} parent=27 // pred_check
          %p613 = pneg %p280
        $region62: #{tpu_custom_call.1} parent=27 // pred_check_branch
          %615 = sbr.rel (%p613) target = $region64
        $region63: #{tpu_custom_call.1} parent=27 // pred_region
          %s616 = sand.u32 %s40, 1
          %s617 = scalar_lea.sflag [#allocation16], %s616
          %s618 = sand.u32 %s270, 1
          %s619 = smul.addr %s618, 64
          %s620 = scalar_lea.vmem [#allocation17], %s619
          %622 = vsyncadd %s617, 0
          %s623 = smul.addr %s48, 16
          %s624 = smul.addr %s623, 4
          %s625 = scalar_lea.hbm %s8, %s624
          %s626 = sshll.u32 %s625, 4
          %s627 = int_to_ptr.hbm [resolvable:$true] %s626
          %s628 = sshll.u32 %s620, 4
          %s629 = int_to_ptr.vmem [resolvable:$true] %s628
          %634 = dma.hbm_to_vmem [thread:$0]  %s627, 1024, %s629, %s617, 64, 64, 4
        $region64: #{tpu_custom_call.1} parent=27 // pred_fallthru
          _
        // Predicated region
        $region65: #{tpu_custom_call.1} parent=27 // pred_check
          %p635 = pneg %p306
        $region66: #{tpu_custom_call.1} parent=27 // pred_check_branch
          %637 = sbr.rel (%p635) target = $region68
        $region67: #{tpu_custom_call.1} parent=27 // pred_region
          %s638 = sand.u32 %s40, 1
          %s639 = scalar_lea.sflag [#allocation19], %s638
          %s640 = sand.u32 %s296, 1
          %s641 = smul.addr %s640, 16
          %s642 = scalar_lea.vmem [#allocation18], %s641
          %644 = vsyncadd %s639, 0
          %s645 = smul.addr %s48, 2
          %s646 = smul.addr %s645, 8
          %s647 = scalar_lea.hbm %s9, %s646
          %s648 = sshll.u32 %s647, 4
          %s649 = int_to_ptr.hbm [resolvable:$true] %s648
          %s650 = sshll.u32 %s642, 4
          %s651 = int_to_ptr.vmem [resolvable:$true] %s650
          %656 = dma.hbm_to_vmem [thread:$0]  %s649, 256, %s651, %s639, 128, 128, 8
        $region68: #{tpu_custom_call.1} parent=27 // pred_fallthru
          _
      $region28: #{tpu_custom_call.1} parent=5 // pred_fallthru
        _
      %p657 = scmp.le.s32.totalorder 1, %s40
      %p658 = scmp.lt.s32.totalorder %s40, 5
      %p659 = pnand %p657, %p658
      %p660 = pneg %p659
      // Predicated region
      $region69: #{tpu_custom_call.1} parent=5 // pred_check
        _
      $region70: #{tpu_custom_call.1} parent=5 // pred_check_branch
        %662 = sbr.rel (%p659) target = $region72
      $region71: #{tpu_custom_call.1} parent=5 // pred_region
        %s663 = ssub.s32 %s40, 1
        %s664 = sand.u32 %s65, 1
        %s665 = scalar_lea.sflag [#allocation4], %s664
        %s666 = sand.u32 %s65, 1
        %s667 = smul.addr %s666, 8
        %s668 = scalar_lea.vmem [#allocation3], %s667
        // Predicated region
        $region73: #{tpu_custom_call.1} parent=71 // pred_check
          %p669 = pneg %p78
        $region74: #{tpu_custom_call.1} parent=71 // pred_check_branch
          %671 = sbr.rel (%p669) target = $region76
        $region75: #{tpu_custom_call.1} parent=71 // pred_region
          %673 = dma.done %s665, 128
        $region76: #{tpu_custom_call.1} parent=71 // pred_fallthru
          _
        %s674 = sand.u32 %s45, 1
        %s675 = scalar_lea.sflag [#allocation7], %s674
        %s676 = sand.u32 %s91, 1
        %s677 = smul.addr %s676, 64
        %s678 = scalar_lea.vmem [#allocation6], %s677
        // Predicated region
        $region77: #{tpu_custom_call.1} parent=71 // pred_check
          %p679 = pneg %p104
        $region78: #{tpu_custom_call.1} parent=71 // pred_check_branch
          %681 = sbr.rel (%p679) target = $region80
        $region79: #{tpu_custom_call.1} parent=71 // pred_region
          %683 = dma.done %s675, 1024
        $region80: #{tpu_custom_call.1} parent=71 // pred_fallthru
          _
        %s684 = sand.u32 %s45, 1
        %s685 = scalar_lea.sflag [#allocation7], %s684
        %s686 = sand.u32 %s117, 1
        %s687 = smul.addr %s686, 64
        %s688 = scalar_lea.vmem [#allocation8], %s687
        // Predicated region
        $region81: #{tpu_custom_call.1} parent=71 // pred_check
          %p689 = pneg %p130
        $region82: #{tpu_custom_call.1} parent=71 // pred_check_branch
          %691 = sbr.rel (%p689) target = $region84
        $region83: #{tpu_custom_call.1} parent=71 // pred_region
          %693 = dma.done %s685, 1024
        $region84: #{tpu_custom_call.1} parent=71 // pred_fallthru
          _
        %s694 = sand.u32 %s45, 1
        %s695 = scalar_lea.sflag [#allocation10], %s694
        %s696 = sand.u32 %s143, 1
        %s697 = smul.addr %s696, 64
        %s698 = scalar_lea.vmem [#allocation9], %s697
        // Predicated region
        $region85: #{tpu_custom_call.1} parent=71 // pred_check
          %p699 = pneg %p156
        $region86: #{tpu_custom_call.1} parent=71 // pred_check_branch
          %701 = sbr.rel (%p699) target = $region88
        $region87: #{tpu_custom_call.1} parent=71 // pred_region
          %703 = dma.done %s695, 1024
        $region88: #{tpu_custom_call.1} parent=71 // pred_fallthru
          _
        %s704 = sand.u32 %s45, 1
        %s705 = scalar_lea.sflag [#allocation10], %s704
        %s706 = sand.u32 %s169, 1
        %s707 = smul.addr %s706, 64
        %s708 = scalar_lea.vmem [#allocation11], %s707
        // Predicated region
        $region89: #{tpu_custom_call.1} parent=71 // pred_check
          %p709 = pneg %p182
        $region90: #{tpu_custom_call.1} parent=71 // pred_check_branch
          %711 = sbr.rel (%p709) target = $region92
        $region91: #{tpu_custom_call.1} parent=71 // pred_region
          %713 = dma.done %s705, 1024
        $region92: #{tpu_custom_call.1} parent=71 // pred_fallthru
          _
        %s714 = sand.u32 %s45, 1
        %s715 = scalar_lea.sflag [#allocation13], %s714
        %s716 = sand.u32 %s195, 1
        %s717 = smul.addr %s716, 64
        %s718 = scalar_lea.vmem [#allocation12], %s717
        // Predicated region
        $region93: #{tpu_custom_call.1} parent=71 // pred_check
          %p719 = pneg %p208
        $region94: #{tpu_custom_call.1} parent=71 // pred_check_branch
          %721 = sbr.rel (%p719) target = $region96
        $region95: #{tpu_custom_call.1} parent=71 // pred_region
          %723 = dma.done %s715, 1024
        $region96: #{tpu_custom_call.1} parent=71 // pred_fallthru
          _
        %s724 = sand.u32 %s45, 1
        %s725 = scalar_lea.sflag [#allocation13], %s724
        %s726 = sand.u32 %s221, 1
        %s727 = smul.addr %s726, 64
        %s728 = scalar_lea.vmem [#allocation14], %s727
        // Predicated region
        $region97: #{tpu_custom_call.1} parent=71 // pred_check
          %p729 = pneg %p234
        $region98: #{tpu_custom_call.1} parent=71 // pred_check_branch
          %731 = sbr.rel (%p729) target = $region100
        $region99: #{tpu_custom_call.1} parent=71 // pred_region
          %733 = dma.done %s725, 1024
        $region100: #{tpu_custom_call.1} parent=71 // pred_fallthru
          _
        %s734 = sand.u32 %s45, 1
        %s735 = scalar_lea.sflag [#allocation16], %s734
        %s736 = sand.u32 %s247, 1
        %s737 = smul.addr %s736, 64
        %s738 = scalar_lea.vmem [#allocation15], %s737
        // Predicated region
        $region101: #{tpu_custom_call.1} parent=71 // pred_check
          %p739 = pneg %p260
        $region102: #{tpu_custom_call.1} parent=71 // pred_check_branch
          %741 = sbr.rel (%p739) target = $region104
        $region103: #{tpu_custom_call.1} parent=71 // pred_region
          %743 = dma.done %s735, 1024
        $region104: #{tpu_custom_call.1} parent=71 // pred_fallthru
          _
        %s744 = sand.u32 %s45, 1
        %s745 = scalar_lea.sflag [#allocation16], %s744
        %s746 = sand.u32 %s273, 1
        %s747 = smul.addr %s746, 64
        %s748 = scalar_lea.vmem [#allocation17], %s747
        // Predicated region
        $region105: #{tpu_custom_call.1} parent=71 // pred_check
          %p749 = pneg %p286
        $region106: #{tpu_custom_call.1} parent=71 // pred_check_branch
          %751 = sbr.rel (%p749) target = $region108
        $region107: #{tpu_custom_call.1} parent=71 // pred_region
          %753 = dma.done %s745, 1024
        $region108: #{tpu_custom_call.1} parent=71 // pred_fallthru
          _
        %s754 = sand.u32 %s45, 1
        %s755 = scalar_lea.sflag [#allocation19], %s754
        %s756 = sand.u32 %s299, 1
        %s757 = smul.addr %s756, 16
        %s758 = scalar_lea.vmem [#allocation18], %s757
        // Predicated region
        $region109: #{tpu_custom_call.1} parent=71 // pred_check
          %p759 = pneg %p312
        $region110: #{tpu_custom_call.1} parent=71 // pred_check_branch
          %761 = sbr.rel (%p759) target = $region112
        $region111: #{tpu_custom_call.1} parent=71 // pred_region
          %763 = dma.done %s755, 256
        $region112: #{tpu_custom_call.1} parent=71 // pred_fallthru
          _
        // Predicated region
        $region113: #{tpu_custom_call.1} parent=71 // pred_check
          %p764 = pneg %p354
        $region114: #{tpu_custom_call.1} parent=71 // pred_check_branch
          %766 = sbr.rel (%p764) target = $region116
        $region115: #{tpu_custom_call.1} parent=71 // pred_region
          %768 = dma.done [#allocation19], 1024
        $region116: #{tpu_custom_call.1} parent=71 // pred_fallthru
          _
        %s769 = sand.u32 %s65, 1
        %s770 = scalar_lea.sflag [#allocation4], %s769
        %s771 = sand.u32 %s65, 1
        %s772 = smul.addr %s771, 8
        %s773 = scalar_lea.vmem [#allocation3], %s772
        %p774 = pneg %p78
        %p775 = pneg %p75
        %s776 = sand.u32 %s45, 1
        %s777 = scalar_lea.sflag [#allocation7], %s776
        %s778 = sand.u32 %s91, 1
        %s779 = smul.addr %s778, 64
        %s780 = scalar_lea.vmem [#allocation6], %s779
        %p781 = pneg %p104
        %p782 = pneg %p101
        %s783 = sand.u32 %s45, 1
        %s784 = scalar_lea.sflag [#allocation7], %s783
        %s785 = sand.u32 %s117, 1
        %s786 = smul.addr %s785, 64
        %s787 = scalar_lea.vmem [#allocation8], %s786
        %p788 = pneg %p130
        %p789 = pneg %p127
        %s790 = sand.u32 %s45, 1
        %s791 = scalar_lea.sflag [#allocation10], %s790
        %s792 = sand.u32 %s143, 1
        %s793 = smul.addr %s792, 64
        %s794 = scalar_lea.vmem [#allocation9], %s793
        %p795 = pneg %p156
        %p796 = pneg %p153
        %s797 = sand.u32 %s45, 1
        %s798 = scalar_lea.sflag [#allocation10], %s797
        %s799 = sand.u32 %s169, 1
        %s800 = smul.addr %s799, 64
        %s801 = scalar_lea.vmem [#allocation11], %s800
        %p802 = pneg %p182
        %p803 = pneg %p179
        %s804 = sand.u32 %s45, 1
        %s805 = scalar_lea.sflag [#allocation13], %s804
        %s806 = sand.u32 %s195, 1
        %s807 = smul.addr %s806, 64
        %s808 = scalar_lea.vmem [#allocation12], %s807
        %p809 = pneg %p208
        %p810 = pneg %p205
        %s811 = sand.u32 %s45, 1
        %s812 = scalar_lea.sflag [#allocation13], %s811
        %s813 = sand.u32 %s221, 1
        %s814 = smul.addr %s813, 64
        %s815 = scalar_lea.vmem [#allocation14], %s814
        %p816 = pneg %p234
        %p817 = pneg %p231
        %s818 = sand.u32 %s45, 1
        %s819 = scalar_lea.sflag [#allocation16], %s818
        %s820 = sand.u32 %s247, 1
        %s821 = smul.addr %s820, 64
        %s822 = scalar_lea.vmem [#allocation15], %s821
        %p823 = pneg %p260
        %p824 = pneg %p257
        %s825 = sand.u32 %s45, 1
        %s826 = scalar_lea.sflag [#allocation16], %s825
        %s827 = sand.u32 %s273, 1
        %s828 = smul.addr %s827, 64
        %s829 = scalar_lea.vmem [#allocation17], %s828
        %p830 = pneg %p286
        %p831 = pneg %p283
        %s832 = sand.u32 %s45, 1
        %s833 = scalar_lea.sflag [#allocation19], %s832
        %s834 = sand.u32 %s299, 1
        %s835 = smul.addr %s834, 16
        %s836 = scalar_lea.vmem [#allocation18], %s835
        %p837 = pneg %p312
        %p838 = pneg %p309
        %p839 = pneg %p333
        %p840 = pneg %p330
        %p841 = pneg %p354
        %p842 = pneg %p351
        %p843 = pneg %p375
        %p844 = pneg %p372
        %p845 = pneg %p401
        %p846 = pneg %p398
        %s847 = sand.u32 %s388, 1
        %s848 = scalar_lea.sflag [#allocation5], %s847
        %s849 = sand.u32 %s388, 1
        %s850 = smul.addr %s849, 8
        %s851 = scalar_lea.vmem [#allocation21], %s850
        %p852 = scmp.eq.s32.totalorder %s50, 0
        // Predicated region
        $region117: #{tpu_custom_call.1} parent=71 // pred_check
          %p853 = pneg %p852
        $region118: #{tpu_custom_call.1} parent=71 // pred_check_branch
          %855 = sbr.rel (%p853) target = $region120
        $region119: #{tpu_custom_call.1} parent=71 // pred_region
          %v856 = vld [vmem:[%s668] sm:$0xff]
          %857 = vst [vmem:[#allocation2] sm:$0xff] %v856
        $region120: #{tpu_custom_call.1} parent=71 // pred_fallthru
          _
        %v858 = vld [vmem:[%s758] sm:$0xff]
        %v859 = vld [vmem:[%s758 + $0x8] sm:$0xff]
        %v860 = vld [vmem:[#allocation2] sm:$0xff]
        %v861 = vpack.c.bf16 %v860, %v860
        %v862 = vld [vmem:[%s678] sm:$0xf]
        %v863 = vld [vmem:[%s678 + $0x4] sm:$0xf]
        %v864 = vld [vmem:[%s678 + $0x8] sm:$0xf]
        %v865 = vld [vmem:[%s678 + $0xc] sm:$0xf]
        %v866 = vld [vmem:[%s678 + $0x10] sm:$0xf]
        %v867 = vld [vmem:[%s678 + $0x14] sm:$0xf]
        %v868 = vld [vmem:[%s678 + $0x18] sm:$0xf]
        %v869 = vld [vmem:[%s678 + $0x1c] sm:$0xf]
        %v870 = vld [vmem:[%s678 + $0x20] sm:$0xf]
        %v871 = vld [vmem:[%s678 + $0x24] sm:$0xf]
        %v872 = vld [vmem:[%s678 + $0x28] sm:$0xf]
        %v873 = vld [vmem:[%s678 + $0x2c] sm:$0xf]
        %v874 = vld [vmem:[%s678 + $0x30] sm:$0xf]
        %v875 = vld [vmem:[%s678 + $0x34] sm:$0xf]
        %v876 = vld [vmem:[%s678 + $0x38] sm:$0xf]
        %v877 = vld [vmem:[%s678 + $0x3c] sm:$0xf]
        %v878 = vld [vmem:[%s688] sm:$0xf]
        %v879 = vld [vmem:[%s688 + $0x4] sm:$0xf]
        %v880 = vld [vmem:[%s688 + $0x8] sm:$0xf]
        %v881 = vld [vmem:[%s688 + $0xc] sm:$0xf]
        %v882 = vld [vmem:[%s688 + $0x10] sm:$0xf]
        %v883 = vld [vmem:[%s688 + $0x14] sm:$0xf]
        %v884 = vld [vmem:[%s688 + $0x18] sm:$0xf]
        %v885 = vld [vmem:[%s688 + $0x1c] sm:$0xf]
        %v886 = vld [vmem:[%s688 + $0x20] sm:$0xf]
        %v887 = vld [vmem:[%s688 + $0x24] sm:$0xf]
        %v888 = vld [vmem:[%s688 + $0x28] sm:$0xf]
        %v889 = vld [vmem:[%s688 + $0x2c] sm:$0xf]
        %v890 = vld [vmem:[%s688 + $0x30] sm:$0xf]
        %v891 = vld [vmem:[%s688 + $0x34] sm:$0xf]
        %v892 = vld [vmem:[%s688 + $0x38] sm:$0xf]
        %v893 = vld [vmem:[%s688 + $0x3c] sm:$0xf]
        %v894 = vld [vmem:[%s698] sm:$0xf]
        %v895 = vld [vmem:[%s698 + $0x4] sm:$0xf]
        %v896 = vld [vmem:[%s698 + $0x8] sm:$0xf]
        %v897 = vld [vmem:[%s698 + $0xc] sm:$0xf]
        %v898 = vld [vmem:[%s698 + $0x10] sm:$0xf]
        %v899 = vld [vmem:[%s698 + $0x14] sm:$0xf]
        %v900 = vld [vmem:[%s698 + $0x18] sm:$0xf]
        %v901 = vld [vmem:[%s698 + $0x1c] sm:$0xf]
        %v902 = vld [vmem:[%s698 + $0x20] sm:$0xf]
        %v903 = vld [vmem:[%s698 + $0x24] sm:$0xf]
        %v904 = vld [vmem:[%s698 + $0x28] sm:$0xf]
        %v905 = vld [vmem:[%s698 + $0x2c] sm:$0xf]
        %v906 = vld [vmem:[%s698 + $0x30] sm:$0xf]
        %v907 = vld [vmem:[%s698 + $0x34] sm:$0xf]
        %v908 = vld [vmem:[%s698 + $0x38] sm:$0xf]
        %v909 = vld [vmem:[%s698 + $0x3c] sm:$0xf]
        %v910 = vperm.slane %v858, 0
        %v927 = vunpack.c.l.b16 %v894
        %v928 = vunpack.c.l.b16 %v895
        %v929 = vunpack.c.l.b16 %v896
        %v930 = vunpack.c.l.b16 %v897
        %v931 = vunpack.c.l.b16 %v898
        %v932 = vunpack.c.l.b16 %v899
        %v933 = vunpack.c.l.b16 %v900
        %v934 = vunpack.c.l.b16 %v901
        %v935 = vunpack.c.l.b16 %v902
        %v936 = vunpack.c.l.b16 %v903
        %v937 = vunpack.c.l.b16 %v904
        %v938 = vunpack.c.l.b16 %v905
        %v939 = vunpack.c.l.b16 %v906
        %v940 = vunpack.c.l.b16 %v907
        %v941 = vunpack.c.l.b16 %v908
        %v942 = vunpack.c.l.b16 %v909
        %v943 = vpack.c.b16 %v928, %v927
        %v944 = vpack.c.b16 %v930, %v929
        %v945 = vpack.c.b16 %v932, %v931
        %v946 = vpack.c.b16 %v934, %v933
        %v947 = vpack.c.b16 %v936, %v935
        %v948 = vpack.c.b16 %v938, %v937
        %v949 = vpack.c.b16 %v940, %v939
        %v950 = vpack.c.b16 %v942, %v941
        %959 = vmatpush.bf16.msra.mxu0 %v950
        %960 = vmatpush.bf16.msra.mxu0 %v949
        %961 = vmatpush.bf16.msra.mxu0 %v948
        %962 = vmatpush.bf16.msra.mxu0 %v947
        %963 = vmatpush.bf16.msra.mxu0 %v946
        %964 = vmatpush.bf16.msra.mxu0 %v945
        %965 = vmatpush.bf16.msra.mxu0 %v944
        %966 = vmatpush.bf16.msra.mxu0 %v943
        %967 = vmatmul.bf16.gmra.mxu0 %v861
        %v968 = vpop.f32.mrf.mxu0
        %v969 = vadd.f32 %v910, %v968
        %v970 = vpop.f32.mrf.mxu0
        %971 = vdwg.mxu0
        %v972 = vld [vmem:[%s708] sm:$0xf]
        %v973 = vld [vmem:[%s708 + $0x4] sm:$0xf]
        %v974 = vld [vmem:[%s708 + $0x8] sm:$0xf]
        %v975 = vld [vmem:[%s708 + $0xc] sm:$0xf]
        %v976 = vld [vmem:[%s708 + $0x10] sm:$0xf]
        %v977 = vld [vmem:[%s708 + $0x14] sm:$0xf]
        %v978 = vld [vmem:[%s708 + $0x18] sm:$0xf]
        %v979 = vld [vmem:[%s708 + $0x1c] sm:$0xf]
        %v980 = vld [vmem:[%s708 + $0x20] sm:$0xf]
        %v981 = vld [vmem:[%s708 + $0x24] sm:$0xf]
        %v982 = vld [vmem:[%s708 + $0x28] sm:$0xf]
        %v983 = vld [vmem:[%s708 + $0x2c] sm:$0xf]
        %v984 = vld [vmem:[%s708 + $0x30] sm:$0xf]
        %v985 = vld [vmem:[%s708 + $0x34] sm:$0xf]
        %v986 = vld [vmem:[%s708 + $0x38] sm:$0xf]
        %v987 = vld [vmem:[%s708 + $0x3c] sm:$0xf]
        %v1004 = vunpack.c.l.b16 %v972
        %v1005 = vunpack.c.l.b16 %v973
        %v1006 = vunpack.c.l.b16 %v974
        %v1007 = vunpack.c.l.b16 %v975
        %v1008 = vunpack.c.l.b16 %v976
        %v1009 = vunpack.c.l.b16 %v977
        %v1010 = vunpack.c.l.b16 %v978
        %v1011 = vunpack.c.l.b16 %v979
        %v1012 = vunpack.c.l.b16 %v980
        %v1013 = vunpack.c.l.b16 %v981
        %v1014 = vunpack.c.l.b16 %v982
        %v1015 = vunpack.c.l.b16 %v983
        %v1016 = vunpack.c.l.b16 %v984
        %v1017 = vunpack.c.l.b16 %v985
        %v1018 = vunpack.c.l.b16 %v986
        %v1019 = vunpack.c.l.b16 %v987
        %v1020 = vpack.c.b16 %v1005, %v1004
        %v1021 = vpack.c.b16 %v1007, %v1006
        %v1022 = vpack.c.b16 %v1009, %v1008
        %v1023 = vpack.c.b16 %v1011, %v1010
        %v1024 = vpack.c.b16 %v1013, %v1012
        %v1025 = vpack.c.b16 %v1015, %v1014
        %v1026 = vpack.c.b16 %v1017, %v1016
        %v1027 = vpack.c.b16 %v1019, %v1018
        %v1052 = vunpack.c.l.b16 %v878
        %v1053 = vunpack.c.l.b16 %v879
        %v1054 = vunpack.c.l.b16 %v880
        %v1055 = vunpack.c.l.b16 %v881
        %v1056 = vunpack.c.l.b16 %v882
        %v1057 = vunpack.c.l.b16 %v883
        %v1058 = vunpack.c.l.b16 %v884
        %v1059 = vunpack.c.l.b16 %v885
        %v1060 = vunpack.c.l.b16 %v886
        %v1061 = vunpack.c.l.b16 %v887
        %v1062 = vunpack.c.l.b16 %v888
        %v1063 = vunpack.c.l.b16 %v889
        %v1064 = vunpack.c.l.b16 %v890
        %v1065 = vunpack.c.l.b16 %v891
        %v1066 = vunpack.c.l.b16 %v892
        %v1067 = vunpack.c.l.b16 %v893
        %v1068 = vpack.c.b16 %v1053, %v1052
        %v1069 = vpack.c.b16 %v1055, %v1054
        %v1070 = vpack.c.b16 %v1057, %v1056
        %v1071 = vpack.c.b16 %v1059, %v1058
        %v1072 = vpack.c.b16 %v1061, %v1060
        %v1073 = vpack.c.b16 %v1063, %v1062
        %v1074 = vpack.c.b16 %v1065, %v1064
        %v1075 = vpack.c.b16 %v1067, %v1066
        %1084 = vmatpush.bf16.msra.mxu0 %v1075
        %1085 = vmatpush.bf16.msra.mxu0 %v1074
        %1086 = vmatpush.bf16.msra.mxu0 %v1073
        %1087 = vmatpush.bf16.msra.mxu0 %v1072
        %1088 = vmatpush.bf16.msra.mxu0 %v1071
        %1089 = vmatpush.bf16.msra.mxu0 %v1070
        %1090 = vmatpush.bf16.msra.mxu0 %v1069
        %1091 = vmatpush.bf16.msra.mxu0 %v1068
        %1092 = vmatmul.bf16.gmra.mxu0 %v1020
        %v1093 = vpop.f32.mrf.mxu0
        %v1094 = vadd.f32 0.0, %v1093
        %v1095 = vpop.f32.mrf.mxu0
        %v1096 = vadd.f32 0.0, %v1095
        %1097 = vmatmul.bf16.gmra.mxu0 %v1021
        %v1098 = vpop.f32.mrf.mxu0
        %v1099 = vadd.f32 0.0, %v1098
        %v1100 = vpop.f32.mrf.mxu0
        %v1101 = vadd.f32 0.0, %v1100
        %1102 = vmatmul.bf16.gmra.mxu0 %v1022
        %v1103 = vpop.f32.mrf.mxu0
        %v1104 = vadd.f32 0.0, %v1103
        %v1105 = vpop.f32.mrf.mxu0
        %v1106 = vadd.f32 0.0, %v1105
        %1107 = vmatmul.bf16.gmra.mxu0 %v1023
        %v1108 = vpop.f32.mrf.mxu0
        %v1109 = vadd.f32 0.0, %v1108
        %v1110 = vpop.f32.mrf.mxu0
        %v1111 = vadd.f32 0.0, %v1110
        %1112 = vmatmul.bf16.gmra.mxu0 %v1024
        %v1113 = vpop.f32.mrf.mxu0
        %v1114 = vadd.f32 0.0, %v1113
        %v1115 = vpop.f32.mrf.mxu0
        %v1116 = vadd.f32 0.0, %v1115
        %1117 = vmatmul.bf16.gmra.mxu0 %v1025
        %v1118 = vpop.f32.mrf.mxu0
        %v1119 = vadd.f32 0.0, %v1118
        %v1120 = vpop.f32.mrf.mxu0
        %v1121 = vadd.f32 0.0, %v1120
        %1122 = vmatmul.bf16.gmra.mxu0 %v1026
        %v1123 = vpop.f32.mrf.mxu0
        %v1124 = vadd.f32 0.0, %v1123
        %v1125 = vpop.f32.mrf.mxu0
        %v1126 = vadd.f32 0.0, %v1125
        %1127 = vmatmul.bf16.gmra.mxu0 %v1027
        %v1128 = vpop.f32.mrf.mxu0
        %v1129 = vadd.f32 0.0, %v1128
        %v1130 = vpop.f32.mrf.mxu0
        %v1131 = vadd.f32 0.0, %v1130
        %1132 = vdwg.mxu0
        %v1133 = vld [vmem:[%s718] sm:$0xf]
        %v1134 = vld [vmem:[%s718 + $0x4] sm:$0xf]
        %v1135 = vld [vmem:[%s718 + $0x8] sm:$0xf]
        %v1136 = vld [vmem:[%s718 + $0xc] sm:$0xf]
        %v1137 = vld [vmem:[%s718 + $0x10] sm:$0xf]
        %v1138 = vld [vmem:[%s718 + $0x14] sm:$0xf]
        %v1139 = vld [vmem:[%s718 + $0x18] sm:$0xf]
        %v1140 = vld [vmem:[%s718 + $0x1c] sm:$0xf]
        %v1141 = vld [vmem:[%s718 + $0x20] sm:$0xf]
        %v1142 = vld [vmem:[%s718 + $0x24] sm:$0xf]
        %v1143 = vld [vmem:[%s718 + $0x28] sm:$0xf]
        %v1144 = vld [vmem:[%s718 + $0x2c] sm:$0xf]
        %v1145 = vld [vmem:[%s718 + $0x30] sm:$0xf]
        %v1146 = vld [vmem:[%s718 + $0x34] sm:$0xf]
        %v1147 = vld [vmem:[%s718 + $0x38] sm:$0xf]
        %v1148 = vld [vmem:[%s718 + $0x3c] sm:$0xf]
        %v1149 = vperm.slane %v858, 2
        %v1166 = vunpack.c.l.b16 %v862
        %v1167 = vunpack.c.l.b16 %v863
        %v1168 = vunpack.c.l.b16 %v864
        %v1169 = vunpack.c.l.b16 %v865
        %v1170 = vunpack.c.l.b16 %v866
        %v1171 = vunpack.c.l.b16 %v867
        %v1172 = vunpack.c.l.b16 %v868
        %v1173 = vunpack.c.l.b16 %v869
        %v1174 = vunpack.c.l.b16 %v870
        %v1175 = vunpack.c.l.b16 %v871
        %v1176 = vunpack.c.l.b16 %v872
        %v1177 = vunpack.c.l.b16 %v873
        %v1178 = vunpack.c.l.b16 %v874
        %v1179 = vunpack.c.l.b16 %v875
        %v1180 = vunpack.c.l.b16 %v876
        %v1181 = vunpack.c.l.b16 %v877
        %v1182 = vpack.c.b16 %v1167, %v1166
        %v1183 = vpack.c.b16 %v1169, %v1168
        %v1184 = vpack.c.b16 %v1171, %v1170
        %v1185 = vpack.c.b16 %v1173, %v1172
        %v1186 = vpack.c.b16 %v1175, %v1174
        %v1187 = vpack.c.b16 %v1177, %v1176
        %v1188 = vpack.c.b16 %v1179, %v1178
        %v1189 = vpack.c.b16 %v1181, %v1180
        %v1214 = vunpack.c.l.b16 %v1133
        %v1215 = vunpack.c.l.b16 %v1134
        %v1216 = vunpack.c.l.b16 %v1135
        %v1217 = vunpack.c.l.b16 %v1136
        %v1218 = vunpack.c.l.b16 %v1137
        %v1219 = vunpack.c.l.b16 %v1138
        %v1220 = vunpack.c.l.b16 %v1139
        %v1221 = vunpack.c.l.b16 %v1140
        %v1222 = vunpack.c.l.b16 %v1141
        %v1223 = vunpack.c.l.b16 %v1142
        %v1224 = vunpack.c.l.b16 %v1143
        %v1225 = vunpack.c.l.b16 %v1144
        %v1226 = vunpack.c.l.b16 %v1145
        %v1227 = vunpack.c.l.b16 %v1146
        %v1228 = vunpack.c.l.b16 %v1147
        %v1229 = vunpack.c.l.b16 %v1148
        %v1230 = vpack.c.b16 %v1215, %v1214
        %v1231 = vpack.c.b16 %v1217, %v1216
        %v1232 = vpack.c.b16 %v1219, %v1218
        %v1233 = vpack.c.b16 %v1221, %v1220
        %v1234 = vpack.c.b16 %v1223, %v1222
        %v1235 = vpack.c.b16 %v1225, %v1224
        %v1236 = vpack.c.b16 %v1227, %v1226
        %v1237 = vpack.c.b16 %v1229, %v1228
        %1246 = vmatpush.bf16.msra.mxu0 %v1237
        %1247 = vmatpush.bf16.msra.mxu0 %v1236
        %1248 = vmatpush.bf16.msra.mxu0 %v1235
        %1249 = vmatpush.bf16.msra.mxu0 %v1234
        %1250 = vmatpush.bf16.msra.mxu0 %v1233
        %1251 = vmatpush.bf16.msra.mxu0 %v1232
        %1252 = vmatpush.bf16.msra.mxu0 %v1231
        %1253 = vmatpush.bf16.msra.mxu0 %v1230
        %1254 = vmatmul.bf16.gmra.mxu0 %v1182
        %v1255 = vpop.f32.mrf.mxu0
        %v1256 = vadd.f32 %v1149, %v1255
        %v1257 = vpop.f32.mrf.mxu0
        %v1258 = vadd.f32 %v1149, %v1257
        %1259 = vmatmul.bf16.gmra.mxu0 %v1183
        %v1260 = vpop.f32.mrf.mxu0
        %v1261 = vadd.f32 %v1149, %v1260
        %v1262 = vpop.f32.mrf.mxu0
        %v1263 = vadd.f32 %v1149, %v1262
        %1264 = vmatmul.bf16.gmra.mxu0 %v1184
        %v1265 = vpop.f32.mrf.mxu0
        %v1266 = vadd.f32 %v1149, %v1265
        %v1267 = vpop.f32.mrf.mxu0
        %v1268 = vadd.f32 %v1149, %v1267
        %1269 = vmatmul.bf16.gmra.mxu0 %v1185
        %v1270 = vpop.f32.mrf.mxu0
        %v1271 = vadd.f32 %v1149, %v1270
        %v1272 = vpop.f32.mrf.mxu0
        %v1273 = vadd.f32 %v1149, %v1272
        %1274 = vmatmul.bf16.gmra.mxu0 %v1186
        %v1275 = vpop.f32.mrf.mxu0
        %v1276 = vadd.f32 %v1149, %v1275
        %v1277 = vpop.f32.mrf.mxu0
        %v1278 = vadd.f32 %v1149, %v1277
        %1279 = vmatmul.bf16.gmra.mxu0 %v1187
        %v1280 = vpop.f32.mrf.mxu0
        %v1281 = vadd.f32 %v1149, %v1280
        %v1282 = vpop.f32.mrf.mxu0
        %v1283 = vadd.f32 %v1149, %v1282
        %1284 = vmatmul.bf16.gmra.mxu0 %v1188
        %v1285 = vpop.f32.mrf.mxu0
        %v1286 = vadd.f32 %v1149, %v1285
        %v1287 = vpop.f32.mrf.mxu0
        %v1288 = vadd.f32 %v1149, %v1287
        %1289 = vmatmul.bf16.gmra.mxu0 %v1189
        %v1290 = vpop.f32.mrf.mxu0
        %v1291 = vadd.f32 %v1149, %v1290
        %v1292 = vpop.f32.mrf.mxu0
        %v1293 = vadd.f32 %v1149, %v1292
        %1294 = vdwg.mxu0
        %v1295 = vpack.c.bf16 %v969, %v969
        %v1296 = vpack.c.bf16 %v1096, %v1094
        %v1297 = vpack.c.bf16 %v1101, %v1099
        %v1298 = vpack.c.bf16 %v1106, %v1104
        %v1299 = vpack.c.bf16 %v1111, %v1109
        %v1300 = vpack.c.bf16 %v1116, %v1114
        %v1301 = vpack.c.bf16 %v1121, %v1119
        %v1302 = vpack.c.bf16 %v1126, %v1124
        %v1303 = vpack.c.bf16 %v1131, %v1129
        %1304 = vmatpush.bf16.msra.mxu0 %v1303
        %1305 = vmatpush.bf16.msra.mxu0 %v1302
        %1306 = vmatpush.bf16.msra.mxu0 %v1301
        %1307 = vmatpush.bf16.msra.mxu0 %v1300
        %1308 = vmatpush.bf16.msra.mxu0 %v1299
        %1309 = vmatpush.bf16.msra.mxu0 %v1298
        %1310 = vmatpush.bf16.msra.mxu0 %v1297
        %1311 = vmatpush.bf16.msra.mxu0 %v1296
        %1312 = vmatmul.bf16.gmra.mxu0 %v1295
        %v1313 = vpop.f32.mrf.mxu0
        %v1314 = vadd.f32 0.0, %v1313
        %v1315 = vpop.f32.mrf.mxu0
        %1316 = vdwg.mxu0
        %v1317 = vlaneseq
        %v1318 = vand.u32 %v1317, 127
        %vm1319 = vcmp.lt.s32.totalorder %v1318, 12
        %v1320 = vsel %vm1319, %v1314, -1e+30
        %1321 = vmax.xlane.f32.xlu0 %v1320
        %v1322 = vpop.xlane.xlu0 %1321
        %v1323 = vsub.f32 %v1320, %v1322
        %v1324 = vmul.f32 %v1323, 1.442695
        %v1325 = vpow.pop %v1324
        %1326 = vadd.xlane.f32.xlu0 %v1325
        %v1327 = vpop.xlane.xlu0 %1326
        %v1328 = vpack.c.bf16 %v1325, %v1325
        %v1329 = vpack.c.bf16 %v1258, %v1256
        %v1330 = vpack.c.bf16 %v1263, %v1261
        %v1331 = vpack.c.bf16 %v1268, %v1266
        %v1332 = vpack.c.bf16 %v1273, %v1271
        %v1333 = vpack.c.bf16 %v1278, %v1276
        %v1334 = vpack.c.bf16 %v1283, %v1281
        %v1335 = vpack.c.bf16 %v1288, %v1286
        %v1336 = vpack.c.bf16 %v1293, %v1291
        %1337 = vmatpush.bf16.msra.mxu0 %v1336
        %1338 = vmatpush.bf16.msra.mxu0 %v1335
        %1339 = vmatpush.bf16.msra.mxu0 %v1334
        %1340 = vmatpush.bf16.msra.mxu0 %v1333
        %1341 = vmatpush.bf16.msra.mxu0 %v1332
        %1342 = vmatpush.bf16.msra.mxu0 %v1331
        %1343 = vmatpush.bf16.msra.mxu0 %v1330
        %1344 = vmatpush.bf16.msra.mxu0 %v1329
        %1345 = vmatmul.bf16.gmra.mxu0 %v1328
        %v1346 = vpop.f32.mrf.mxu0
        %v1347 = vadd.f32 0.0, %v1346
        %v1348 = vpop.f32.mrf.mxu0
        %1349 = vdwg.mxu0
        %v1350 = vrcp.pop %v1327
        %v1351 = vmul.f32 %v1327, %v1350
        %v1352 = vsub.f32 1.0, %v1351
        %v1353 = vmul.f32 %v1350, %v1352
        %v1354 = vadd.f32 %v1350, %v1353
        %vm1355 = vweird.f32 %v1327
        %vm1356 = vweird.f32 %v1350
        %vm1357 = vmor %vm1355, %vm1356
        %v1358 = vsel %vm1357, %v1350, %v1354
        %v1359 = vand.u32 2147483647, %v1327
        %vm1360 = vcmp.eq.f32.partialorder %v1359, 8.507059e+37
        %v1361 = vand.u32 %v1327, 2147483648
        %v1362 = vor.u32 1.1754944e-38, %v1361
        %v1363 = vsel %vm1360, %v1362, %v1358
        %v1364 = vmul.f32 %v1347, %v1363
        %v1365 = vpack.c.bf16 %v1364, %v1364
        %v1366 = vld [vmem:[%s728] sm:$0xf]
        %v1367 = vld [vmem:[%s728 + $0x4] sm:$0xf]
        %v1368 = vld [vmem:[%s728 + $0x8] sm:$0xf]
        %v1369 = vld [vmem:[%s728 + $0xc] sm:$0xf]
        %v1370 = vld [vmem:[%s728 + $0x10] sm:$0xf]
        %v1371 = vld [vmem:[%s728 + $0x14] sm:$0xf]
        %v1372 = vld [vmem:[%s728 + $0x18] sm:$0xf]
        %v1373 = vld [vmem:[%s728 + $0x1c] sm:$0xf]
        %v1374 = vld [vmem:[%s728 + $0x20] sm:$0xf]
        %v1375 = vld [vmem:[%s728 + $0x24] sm:$0xf]
        %v1376 = vld [vmem:[%s728 + $0x28] sm:$0xf]
        %v1377 = vld [vmem:[%s728 + $0x2c] sm:$0xf]
        %v1378 = vld [vmem:[%s728 + $0x30] sm:$0xf]
        %v1379 = vld [vmem:[%s728 + $0x34] sm:$0xf]
        %v1380 = vld [vmem:[%s728 + $0x38] sm:$0xf]
        %v1381 = vld [vmem:[%s728 + $0x3c] sm:$0xf]
        %v1382 = vperm.slane %v858, 3
        %v1399 = vunpack.c.l.b16 %v1366
        %v1400 = vunpack.c.l.b16 %v1367
        %v1401 = vunpack.c.l.b16 %v1368
        %v1402 = vunpack.c.l.b16 %v1369
        %v1403 = vunpack.c.l.b16 %v1370
        %v1404 = vunpack.c.l.b16 %v1371
        %v1405 = vunpack.c.l.b16 %v1372
        %v1406 = vunpack.c.l.b16 %v1373
        %v1407 = vunpack.c.l.b16 %v1374
        %v1408 = vunpack.c.l.b16 %v1375
        %v1409 = vunpack.c.l.b16 %v1376
        %v1410 = vunpack.c.l.b16 %v1377
        %v1411 = vunpack.c.l.b16 %v1378
        %v1412 = vunpack.c.l.b16 %v1379
        %v1413 = vunpack.c.l.b16 %v1380
        %v1414 = vunpack.c.l.b16 %v1381
        %v1415 = vpack.c.b16 %v1400, %v1399
        %v1416 = vpack.c.b16 %v1402, %v1401
        %v1417 = vpack.c.b16 %v1404, %v1403
        %v1418 = vpack.c.b16 %v1406, %v1405
        %v1419 = vpack.c.b16 %v1408, %v1407
        %v1420 = vpack.c.b16 %v1410, %v1409
        %v1421 = vpack.c.b16 %v1412, %v1411
        %v1422 = vpack.c.b16 %v1414, %v1413
        %1431 = vmatpush.bf16.msra.mxu0 %v1422
        %1432 = vmatpush.bf16.msra.mxu0 %v1421
        %1433 = vmatpush.bf16.msra.mxu0 %v1420
        %1434 = vmatpush.bf16.msra.mxu0 %v1419
        %1435 = vmatpush.bf16.msra.mxu0 %v1418
        %1436 = vmatpush.bf16.msra.mxu0 %v1417
        %1437 = vmatpush.bf16.msra.mxu0 %v1416
        %1438 = vmatpush.bf16.msra.mxu0 %v1415
        %1439 = vmatmul.bf16.gmra.mxu0 %v1365
        %v1440 = vpop.f32.mrf.mxu0
        %v1441 = vadd.f32 %v1382, %v1440
        %v1442 = vpop.f32.mrf.mxu0
        %1443 = vdwg.mxu0
        %v1444 = vadd.f32 %v860, %v1441
        %1445 = vadd.xlane.f32.xlu0 %v1444
        %v1446 = vpop.xlane.xlu0 %1445
        %v1447 = vmul.f32 %v1446, 0.03125
        %v1448 = vmul.f32 %v1444, %v1444
        %1449 = vadd.xlane.f32.xlu0 %v1448
        %v1450 = vpop.xlane.xlu0 %1449
        %v1451 = vmul.f32 %v1450, 0.03125
        %v1452 = vmul.f32 %v1447, %v1447
        %v1453 = vsub.f32 %v1451, %v1452
        %v1454 = vmax.f32 %v1453, 0.0
        %v1455 = vsub.f32 %v1444, %v1447
        %v1456 = vadd.f32 %v1454, 1e-05
        %v1457 = vrsqrt.pop %v1456
        %v1458 = vmul.f32 %v1457, %v1456
        %v1459 = vmul.f32 %v1458, %v1457
        %v1460 = vmul.f32 0.5, %v1459
        %v1461 = vsub.f32 1.5, %v1460
        %v1462 = vmul.f32 %v1457, %v1461
        %vm1463 = vweird.f32 %v1456
        %vm1464 = vweird.f32 %v1457
        %vm1465 = vmor %vm1463, %vm1464
        %v1466 = vsel %vm1465, %v1457, %v1462
        %v1467 = vmul.f32 %v1455, %v1466
        %v1468 = vperm.slane %v858, 6
        %v1469 = vmul.f32 %v1467, %v1468
        %v1470 = vperm.slane %v858, 7
        %v1471 = vadd.f32 %v1469, %v1470
        %v1472 = vpack.c.bf16 %v1471, %v1471
        %v1473 = vld [vmem:[%s738] sm:$0xf]
        %v1474 = vld [vmem:[%s738 + $0x4] sm:$0xf]
        %v1475 = vld [vmem:[%s738 + $0x8] sm:$0xf]
        %v1476 = vld [vmem:[%s738 + $0xc] sm:$0xf]
        %v1477 = vld [vmem:[%s738 + $0x10] sm:$0xf]
        %v1478 = vld [vmem:[%s738 + $0x14] sm:$0xf]
        %v1479 = vld [vmem:[%s738 + $0x18] sm:$0xf]
        %v1480 = vld [vmem:[%s738 + $0x1c] sm:$0xf]
        %v1481 = vld [vmem:[%s738 + $0x20] sm:$0xf]
        %v1482 = vld [vmem:[%s738 + $0x24] sm:$0xf]
        %v1483 = vld [vmem:[%s738 + $0x28] sm:$0xf]
        %v1484 = vld [vmem:[%s738 + $0x2c] sm:$0xf]
        %v1485 = vld [vmem:[%s738 + $0x30] sm:$0xf]
        %v1486 = vld [vmem:[%s738 + $0x34] sm:$0xf]
        %v1487 = vld [vmem:[%s738 + $0x38] sm:$0xf]
        %v1488 = vld [vmem:[%s738 + $0x3c] sm:$0xf]
        %v1489 = vperm.slane %v858, 4
        %v1506 = vunpack.c.l.b16 %v1473
        %v1507 = vunpack.c.l.b16 %v1474
        %v1508 = vunpack.c.l.b16 %v1475
        %v1509 = vunpack.c.l.b16 %v1476
        %v1510 = vunpack.c.l.b16 %v1477
        %v1511 = vunpack.c.l.b16 %v1478
        %v1512 = vunpack.c.l.b16 %v1479
        %v1513 = vunpack.c.l.b16 %v1480
        %v1514 = vunpack.c.l.b16 %v1481
        %v1515 = vunpack.c.l.b16 %v1482
        %v1516 = vunpack.c.l.b16 %v1483
        %v1517 = vunpack.c.l.b16 %v1484
        %v1518 = vunpack.c.l.b16 %v1485
        %v1519 = vunpack.c.l.b16 %v1486
        %v1520 = vunpack.c.l.b16 %v1487
        %v1521 = vunpack.c.l.b16 %v1488
        %v1522 = vpack.c.b16 %v1507, %v1506
        %v1523 = vpack.c.b16 %v1509, %v1508
        %v1524 = vpack.c.b16 %v1511, %v1510
        %v1525 = vpack.c.b16 %v1513, %v1512
        %v1526 = vpack.c.b16 %v1515, %v1514
        %v1527 = vpack.c.b16 %v1517, %v1516
        %v1528 = vpack.c.b16 %v1519, %v1518
        %v1529 = vpack.c.b16 %v1521, %v1520
        %1538 = vmatpush.bf16.msra.mxu0 %v1529
        %1539 = vmatpush.bf16.msra.mxu0 %v1528
        %1540 = vmatpush.bf16.msra.mxu0 %v1527
        %1541 = vmatpush.bf16.msra.mxu0 %v1526
        %1542 = vmatpush.bf16.msra.mxu0 %v1525
        %1543 = vmatpush.bf16.msra.mxu0 %v1524
        %1544 = vmatpush.bf16.msra.mxu0 %v1523
        %1545 = vmatpush.bf16.msra.mxu0 %v1522
        %1546 = vmatmul.bf16.gmra.mxu0 %v1472
        %v1547 = vpop.f32.mrf.mxu0
        %v1548 = vadd.f32 %v1489, %v1547
        %v1549 = vpop.f32.mrf.mxu0
        %1550 = vdwg.mxu0
        %v1551 = vmax.f32 %v1548, 0.0
        %v1552 = vpack.c.bf16 %v1551, %v1551
        %v1553 = vld [vmem:[%s748] sm:$0xf]
        %v1554 = vld [vmem:[%s748 + $0x4] sm:$0xf]
        %v1555 = vld [vmem:[%s748 + $0x8] sm:$0xf]
        %v1556 = vld [vmem:[%s748 + $0xc] sm:$0xf]
        %v1557 = vld [vmem:[%s748 + $0x10] sm:$0xf]
        %v1558 = vld [vmem:[%s748 + $0x14] sm:$0xf]
        %v1559 = vld [vmem:[%s748 + $0x18] sm:$0xf]
        %v1560 = vld [vmem:[%s748 + $0x1c] sm:$0xf]
        %v1561 = vld [vmem:[%s748 + $0x20] sm:$0xf]
        %v1562 = vld [vmem:[%s748 + $0x24] sm:$0xf]
        %v1563 = vld [vmem:[%s748 + $0x28] sm:$0xf]
        %v1564 = vld [vmem:[%s748 + $0x2c] sm:$0xf]
        %v1565 = vld [vmem:[%s748 + $0x30] sm:$0xf]
        %v1566 = vld [vmem:[%s748 + $0x34] sm:$0xf]
        %v1567 = vld [vmem:[%s748 + $0x38] sm:$0xf]
        %v1568 = vld [vmem:[%s748 + $0x3c] sm:$0xf]
        %v1569 = vperm.slane %v858, 5
        %v1586 = vunpack.c.l.b16 %v1553
        %v1587 = vunpack.c.l.b16 %v1554
        %v1588 = vunpack.c.l.b16 %v1555
        %v1589 = vunpack.c.l.b16 %v1556
        %v1590 = vunpack.c.l.b16 %v1557
        %v1591 = vunpack.c.l.b16 %v1558
        %v1592 = vunpack.c.l.b16 %v1559
        %v1593 = vunpack.c.l.b16 %v1560
        %v1594 = vunpack.c.l.b16 %v1561
        %v1595 = vunpack.c.l.b16 %v1562
        %v1596 = vunpack.c.l.b16 %v1563
        %v1597 = vunpack.c.l.b16 %v1564
        %v1598 = vunpack.c.l.b16 %v1565
        %v1599 = vunpack.c.l.b16 %v1566
        %v1600 = vunpack.c.l.b16 %v1567
        %v1601 = vunpack.c.l.b16 %v1568
        %v1602 = vpack.c.b16 %v1587, %v1586
        %v1603 = vpack.c.b16 %v1589, %v1588
        %v1604 = vpack.c.b16 %v1591, %v1590
        %v1605 = vpack.c.b16 %v1593, %v1592
        %v1606 = vpack.c.b16 %v1595, %v1594
        %v1607 = vpack.c.b16 %v1597, %v1596
        %v1608 = vpack.c.b16 %v1599, %v1598
        %v1609 = vpack.c.b16 %v1601, %v1600
        %1618 = vmatpush.bf16.msra.mxu0 %v1609
        %1619 = vmatpush.bf16.msra.mxu0 %v1608
        %1620 = vmatpush.bf16.msra.mxu0 %v1607
        %1621 = vmatpush.bf16.msra.mxu0 %v1606
        %1622 = vmatpush.bf16.msra.mxu0 %v1605
        %1623 = vmatpush.bf16.msra.mxu0 %v1604
        %1624 = vmatpush.bf16.msra.mxu0 %v1603
        %1625 = vmatpush.bf16.msra.mxu0 %v1602
        %1626 = vmatmul.bf16.gmra.mxu0 %v1552
        %v1627 = vpop.f32.mrf.mxu0
        %v1628 = vadd.f32 %v1569, %v1627
        %v1629 = vpop.f32.mrf.mxu0
        %1630 = vdwg.mxu0
        %v1631 = vadd.f32 %v1471, %v1628
        %1632 = vadd.xlane.f32.xlu0 %v1631
        %v1633 = vpop.xlane.xlu0 %1632
        %v1634 = vmul.f32 %v1633, 0.03125
        %v1635 = vmul.f32 %v1631, %v1631
        %1636 = vadd.xlane.f32.xlu0 %v1635
        %v1637 = vpop.xlane.xlu0 %1636
        %v1638 = vmul.f32 %v1637, 0.03125
        %v1639 = vmul.f32 %v1634, %v1634
        %v1640 = vsub.f32 %v1638, %v1639
        %v1641 = vmax.f32 %v1640, 0.0
        %v1642 = vsub.f32 %v1631, %v1634
        %v1643 = vadd.f32 %v1641, 1e-05
        %v1644 = vrsqrt.pop %v1643
        %v1645 = vmul.f32 %v1644, %v1643
        %v1646 = vmul.f32 %v1645, %v1644
        %v1647 = vmul.f32 0.5, %v1646
        %v1648 = vsub.f32 1.5, %v1647
        %v1649 = vmul.f32 %v1644, %v1648
        %vm1650 = vweird.f32 %v1643
        %vm1651 = vweird.f32 %v1644
        %vm1652 = vmor %vm1650, %vm1651
        %v1653 = vsel %vm1652, %v1644, %v1649
        %v1654 = vmul.f32 %v1642, %v1653
        %v1655 = vperm.slane %v859, 0
        %v1656 = vmul.f32 %v1654, %v1655
        %v1657 = vperm.slane %v859, 1
        %v1658 = vadd.f32 %v1656, %v1657
        %1659 = vst [vmem:[#allocation2] sm:$0xff] %v1658
        %p1660 = scmp.eq.s32.totalorder %s50, 1
        // Predicated region
        $region121: #{tpu_custom_call.1} parent=71 // pred_check
          %p1661 = pneg %p1660
        $region122: #{tpu_custom_call.1} parent=71 // pred_check_branch
          %1663 = sbr.rel (%p1661) target = $region124
        $region123: #{tpu_custom_call.1} parent=71 // pred_region
          %v1664 = vld [vmem:[#allocation2] sm:$0xff]
          %1665 = vadd.xlane.f32.xlu0 %v1664
          %v1666 = vpop.xlane.xlu0 %1665
          %v1667 = vmul.f32 %v1666, 0.03125
          %v1668 = vmul.f32 %v1664, %v1664
          %1669 = vadd.xlane.f32.xlu0 %v1668
          %v1670 = vpop.xlane.xlu0 %1669
          %v1671 = vmul.f32 %v1670, 0.03125
          %v1672 = vmul.f32 %v1667, %v1667
          %v1673 = vsub.f32 %v1671, %v1672
          %v1674 = vmax.f32 %v1673, 0.0
          %v1675 = vsub.f32 %v1664, %v1667
          %v1676 = vadd.f32 %v1674, 1e-05
          %v1677 = vrsqrt.pop %v1676
          %v1678 = vmul.f32 %v1677, %v1676
          %v1679 = vmul.f32 %v1678, %v1677
          %v1680 = vmul.f32 0.5, %v1679
          %v1681 = vsub.f32 1.5, %v1680
          %v1682 = vmul.f32 %v1677, %v1681
          %vm1683 = vweird.f32 %v1676
          %vm1684 = vweird.f32 %v1677
          %vm1685 = vmor %vm1683, %vm1684
          %v1686 = vsel %vm1685, %v1677, %v1682
          %v1687 = vmul.f32 %v1675, %v1686
          %v1688 = vld [vmem:[%s10] sm:$0x1]
          %v1689 = vperm.slane %v1688, 0
          %v1690 = vmul.f32 %v1687, %v1689
          %v1691 = vld [vmem:[%s10 + $0x1] sm:$0x1]
          %v1692 = vperm.slane %v1691, 0
          %v1693 = vadd.f32 %v1690, %v1692
          %v1694 = vpack.c.bf16 %v1693, %v1693
          %v1695 = vld [vmem:[#allocation20] sm:$0xf]
          %v1696 = vld [vmem:[#allocation20 + $0x4] sm:$0xf]
          %v1697 = vld [vmem:[#allocation20 + $0x8] sm:$0xf]
          %v1698 = vld [vmem:[#allocation20 + $0xc] sm:$0xf]
          %v1699 = vld [vmem:[#allocation20 + $0x10] sm:$0xf]
          %v1700 = vld [vmem:[#allocation20 + $0x14] sm:$0xf]
          %v1701 = vld [vmem:[#allocation20 + $0x18] sm:$0xf]
          %v1702 = vld [vmem:[#allocation20 + $0x1c] sm:$0xf]
          %v1703 = vld [vmem:[#allocation20 + $0x20] sm:$0xf]
          %v1704 = vld [vmem:[#allocation20 + $0x24] sm:$0xf]
          %v1705 = vld [vmem:[#allocation20 + $0x28] sm:$0xf]
          %v1706 = vld [vmem:[#allocation20 + $0x2c] sm:$0xf]
          %v1707 = vld [vmem:[#allocation20 + $0x30] sm:$0xf]
          %v1708 = vld [vmem:[#allocation20 + $0x34] sm:$0xf]
          %v1709 = vld [vmem:[#allocation20 + $0x38] sm:$0xf]
          %v1710 = vld [vmem:[#allocation20 + $0x3c] sm:$0xf]
          %v1711 = vld [vmem:[%s12] sm:$0x1]
          %v1713 = vperm.slane %v1711, 0
          %v1731 = vunpack.c.l.b16 %v1695
          %v1732 = vunpack.c.l.b16 %v1696
          %v1733 = vunpack.c.l.b16 %v1697
          %v1734 = vunpack.c.l.b16 %v1698
          %v1735 = vunpack.c.l.b16 %v1699
          %v1736 = vunpack.c.l.b16 %v1700
          %v1737 = vunpack.c.l.b16 %v1701
          %v1738 = vunpack.c.l.b16 %v1702
          %v1739 = vunpack.c.l.b16 %v1703
          %v1740 = vunpack.c.l.b16 %v1704
          %v1741 = vunpack.c.l.b16 %v1705
          %v1742 = vunpack.c.l.b16 %v1706
          %v1743 = vunpack.c.l.b16 %v1707
          %v1744 = vunpack.c.l.b16 %v1708
          %v1745 = vunpack.c.l.b16 %v1709
          %v1746 = vunpack.c.l.b16 %v1710
          %v1747 = vpack.c.b16 %v1732, %v1731
          %v1748 = vpack.c.b16 %v1734, %v1733
          %v1749 = vpack.c.b16 %v1736, %v1735
          %v1750 = vpack.c.b16 %v1738, %v1737
          %v1751 = vpack.c.b16 %v1740, %v1739
          %v1752 = vpack.c.b16 %v1742, %v1741
          %v1753 = vpack.c.b16 %v1744, %v1743
          %v1754 = vpack.c.b16 %v1746, %v1745
          %1763 = vmatpush.bf16.msra.mxu0 %v1754
          %1764 = vmatpush.bf16.msra.mxu0 %v1753
          %1765 = vmatpush.bf16.msra.mxu0 %v1752
          %1766 = vmatpush.bf16.msra.mxu0 %v1751
          %1767 = vmatpush.bf16.msra.mxu0 %v1750
          %1768 = vmatpush.bf16.msra.mxu0 %v1749
          %1769 = vmatpush.bf16.msra.mxu0 %v1748
          %1770 = vmatpush.bf16.msra.mxu0 %v1747
          %1771 = vmatmul.bf16.gmra.mxu0 %v1694
          %v1772 = vpop.f32.mrf.mxu0
          %v1773 = vadd.f32 %v1713, %v1772
          %v1774 = vpop.f32.mrf.mxu0
          %1775 = vdwg.mxu0
          %1776 = vst [vmem:[%s851] sm:$0xff] %v1773
        $region124: #{tpu_custom_call.1} parent=71 // pred_fallthru
          _
        %s1777 = sand.u32 %s388, 1
        %s1778 = scalar_lea.sflag [#allocation5], %s1777
        %s1779 = sand.u32 %s388, 1
        %s1780 = smul.addr %s1779, 8
        %s1781 = scalar_lea.vmem [#allocation21], %s1780
        // Predicated region
        $region125: #{tpu_custom_call.1} parent=71 // pred_check
          %p1782 = pneg %p398
        $region126: #{tpu_custom_call.1} parent=71 // pred_check_branch
          %1784 = sbr.rel (%p1782) target = $region128
        $region127: #{tpu_custom_call.1} parent=71 // pred_region
          %1786 = vsyncadd %s1778, 0
          %s1787 = smul.addr %s49, 8
          %s1788 = scalar_lea.hbm %s13, %s1787
          %s1790 = sshll.u32 %s1781, 4
          %s1791 = int_to_ptr.vmem [resolvable:$true] %s1790
          %s1792 = sshll.u32 %s1788, 4
          %s1793 = int_to_ptr.hbm [resolvable:$true] %s1792
          %1795 = dma.vmem_to_hbm [thread:$0]  %s1791, 128, %s1793, %s1778
        $region128: #{tpu_custom_call.1} parent=71 // pred_fallthru
          _
      $region72: #{tpu_custom_call.1} parent=5 // pred_fallthru
        _
      %p1796 = scmp.le.s32.totalorder 2, %s40
      // Predicated region
      $region129: #{tpu_custom_call.1} parent=5 // pred_check
        %p1797 = pneg %p1796
      $region130: #{tpu_custom_call.1} parent=5 // pred_check_branch
        %1799 = sbr.rel (%p1797) target = $region132
      $region131: #{tpu_custom_call.1} parent=5 // pred_region
        %s1800 = ssub.s32 %s40, 2
        // Predicated region
        $region133: #{tpu_custom_call.1} parent=131 // pred_check
          %p1801 = pneg %p404
        $region134: #{tpu_custom_call.1} parent=131 // pred_check_branch
          %1803 = sbr.rel (%p1801) target = $region136
        $region135: #{tpu_custom_call.1} parent=131 // pred_region
          %s1804 = sand.u32 %s389, 1
          %s1805 = scalar_lea.sflag [#allocation5], %s1804
          %s1806 = sand.u32 %s389, 1
          %s1807 = smul.addr %s1806, 8
          %s1808 = scalar_lea.vmem [#allocation21], %s1807
          %1810 = dma.done %s1805, 128
        $region136: #{tpu_custom_call.1} parent=131 // pred_fallthru
          _
      $region132: #{tpu_custom_call.1} parent=5 // pred_fallthru
        _
    $region6: #{tpu_custom_call.1} parent=1 // loop_footer
      %s44 = sadd.s32 1, %s40
    $region7: #{tpu_custom_call.1} parent=1 // loop_footer_branch
      %39 = sbr.rel target = $region3
    $region8: #{tpu_custom_call.1} parent=1 // loop_exit
      _
    %1811 = vsyncpa [#allocation4], 1
    %s1812 = scalar_lea.sflag [#allocation4], 1
    %1813 = vsyncpa %s1812, 1
    %1814 = vsyncpa [#allocation7], 1
    %s1815 = scalar_lea.sflag [#allocation7], 1
    %1816 = vsyncpa %s1815, 1
    %1817 = vsyncpa [#allocation10], 1
    %s1818 = scalar_lea.sflag [#allocation10], 1
    %1819 = vsyncpa %s1818, 1
    %1820 = vsyncpa [#allocation13], 1
    %s1821 = scalar_lea.sflag [#allocation13], 1
    %1822 = vsyncpa %s1821, 1
    %1823 = vsyncpa [#allocation16], 1
    %s1824 = scalar_lea.sflag [#allocation16], 1
    %1825 = vsyncpa %s1824, 1
    %1826 = vsyncpa [#allocation19], 1
    %s1827 = scalar_lea.sflag [#allocation19], 1
    %1828 = vsyncpa %s1827, 1
    %1829 = vsyncpa [#allocation5], 1
    %s1830 = scalar_lea.sflag [#allocation5], 1
    %1831 = vsyncpa %s1830, 1

</llo_original>
